<compile_context>
chip_gen: v6e
topology: v6e:2x2x1
jax: 0.10.0
libtpu: 0.0.40
codegen_flags: <defaults>
</compile_context>

<pallas_src>
from functools import partial

import jax
import jax.numpy as jnp
import numpy as np
from jax.experimental import pallas as pl
from jax.experimental.pallas import tpu as pltpu

_NEG = -1e30  # logit for padded atom slots: exp underflows to 0, never wins the max


def _round_up(x, m):
    return (x + m - 1) // m * m


# --------------------------------------------------------------------------
# Fused kernel: [adv|value] MLP -> bin gather -> dueling combine -> softmax.
# One grid step per batch tile of block_m rows (rows = levels*bs, padded).
# --------------------------------------------------------------------------
def _c2f_fused_kernel(x_ref, w1_ref, b1_ref,
                      w2a_ref, b2a_ref, w2v_ref, b2v_ref,
                      woa_ref, boa_ref, wov_ref, bov_ref,
                      seg_ref, idx_ref, out_ref, *,
                      hidden_pad, bins, head_w, log_softmax):
    f32 = jnp.float32
    x = x_ref[...]                                               # (bm, in_dim) bf16

    # ---- fused first layer: adv and value trunks share the input ----------
    h1 = jnp.dot(x, w1_ref[...], preferred_element_type=f32) + b1_ref[...]
    h1 = jnp.maximum(h1, 0.0)                                    # (bm, 2*hidden_pad)
    ha = h1[:, :hidden_pad].astype(x.dtype)                      # lane-aligned split
    hv = h1[:, hidden_pad:].astype(x.dtype)

    # ---- second layers ------------------------------------------------------
    ha = jnp.maximum(
        jnp.dot(ha, w2a_ref[...], preferred_element_type=f32) + b2a_ref[...],
        0.0).astype(x.dtype)
    hv = jnp.maximum(
        jnp.dot(hv, w2v_ref[...], preferred_element_type=f32) + b2v_ref[...],
        0.0).astype(x.dtype)

    # ---- output heads (f32 accumulate, stay resident in VMEM) -------------
    # woa/boa are pre-centered over bins (dueling mean folded in) and stored
    # bin-major with each per-bin group 128-lane padded to width head_w.
    adv = jnp.dot(ha, woa_ref[...], preferred_element_type=f32) + boa_ref[...]
    val = jnp.dot(hv, wov_ref[...], preferred_element_type=f32) + bov_ref[...]
    # adv: (bm, bins*head_w), val: (bm, head_w)

    # ---- gather the encoded-action bin: bins whole 128-aligned slices -----
    idxr = idx_ref[...]                                          # (bm, head_w) int32
    sel = jnp.zeros_like(val)
    for k in range(bins):                                        # static, small
        sel = sel + jnp.where(idxr == k, adv[:, k * head_w:(k + 1) * head_w], 0.0)

    logit = val + sel               # dueling combine (mean already folded out)

    # ---- softmax over each atoms_pad lane segment --------------------------
    # Shift by the per-row max (one efficient full-width reduce -> exp never
    # overflows), then get per-segment sums broadcast in place via one
    # block-diagonal MXU matmul.  Exact softmax; only a pathological intra-row
    # logit spread > ~88 could underflow a whole segment.
    rm = jnp.max(logit, axis=-1, keepdims=True)
    e = jnp.exp(logit - rm)                                      # (bm, head_w)
    ssum = jnp.dot(e, seg_ref[...], preferred_element_type=f32)  # segment sums
    if log_softmax:
        out_ref[...] = (logit - rm) - jnp.log(ssum)
    else:
        out_ref[...] = e * pl.reciprocal(ssum, approx=True)


# --------------------------------------------------------------------------
# One-time weight preparation (hoisted out of the forward, cache the result).
# --------------------------------------------------------------------------
def prepare_c2f_params(params, *, levels, bins, atoms, actor_dim):
    f32, bf16 = jnp.float32, jnp.bfloat16
    D = actor_dim
    in_dim = params["w1a"].shape[0]
    hidden = params["w1a"].shape[1]
    hidden_pad = _round_up(hidden, 128)
    atoms_pad = 1 << (atoms - 1).bit_length()            # power of two, divides 128
    assert atoms_pad <= 128, "atoms > 128 not supported"
    head_w = _round_up(D * atoms_pad, 128)

    def pad2(w, rows, cols):
        w = w.astype(f32)
        return jnp.pad(w, ((0, rows - w.shape[0]), (0, cols - w.shape[1])))

    # fused [adv | value] first layer; zero-pad hidden -> hidden_pad (exact).
    w1 = jnp.concatenate([pad2(params["w1a"], in_dim, hidden_pad),
                          pad2(params["w1v"], in_dim, hidden_pad)], axis=1)
    b1 = jnp.concatenate([pad2(params["b1a"], 1, hidden_pad),
                          pad2(params["b1v"], 1, hidden_pad)], axis=1)
    w2a = pad2(params["w2a"], hidden_pad, hidden_pad)
    b2a = pad2(params["b2a"], 1, hidden_pad)
    w2v = pad2(params["w2v"], hidden_pad, hidden_pad)
    b2v = pad2(params["b2v"], 1, hidden_pad)

    # advantage head: fold the dueling bin-mean into the weights (in f32,
    # before the bf16 cast), then permute to bin-major, 128-lane-padded layout:
    # columns = [bin0 group | bin1 group | ...], each group =
    # [d0 atoms_pad | d1 atoms_pad | ... | zero tail to head_w].
    woa = params["woa"].astype(f32).reshape(hidden, D, bins, atoms)
    boa = params["boa"].astype(f32).reshape(1, D, bins, atoms)
    woa = woa - woa.mean(axis=2, keepdims=True)
    boa = boa - boa.mean(axis=2, keepdims=True)

    def adv_layout(w):
        r = w.shape[0]
        wp = jnp.zeros((r, D, bins, atoms_pad), f32).at[..., :atoms].set(w)
        wp = wp.transpose(0, 2, 1, 3).reshape(r, bins, D * atoms_pad)
        wp = jnp.pad(wp, ((0, 0), (0, 0), (0, head_w - D * atoms_pad)))
        return wp.reshape(r, bins * head_w)

    woa_p = jnp.pad(adv_layout(woa), ((0, hidden_pad - hidden), (0, 0)))
    boa_p = adv_layout(boa)

    # value head: same (d, atom) layout; padded atom slots get a very negative
    # bias so they never contribute to the softmax (tail pad stays 0, sliced off).
    wov = params["wov"].astype(f32).reshape(hidden, D, atoms)
    bov = params["bov"].astype(f32).reshape(1, D, atoms)
    wov_p = jnp.zeros((hidden, D, atoms_pad), f32).at[..., :atoms].set(wov)
    wov_p = wov_p.reshape(hidden, D * atoms_pad)
    wov_p = jnp.pad(wov_p, ((0, hidden_pad - hidden), (0, head_w - D * atoms_pad)))
    bov_p = jnp.full((1, D, atoms_pad), _NEG, f32).at[..., :atoms].set(bov)
    bov_p = bov_p.reshape(1, D * atoms_pad)
    bov_p = jnp.pad(bov_p, ((0, 0), (0, head_w - D * atoms_pad)))

    # block-diagonal segment-sum matrix (softmax denominator via one matmul).
    seg_id = jnp.arange(head_w) // atoms_pad
    seg = (seg_id[:, None] == seg_id[None, :]).astype(f32)

    return dict(
        w1=w1.astype(bf16), b1=b1,
        w2a=w2a.astype(bf16), b2a=b2a, w2v=w2v.astype(bf16), b2v=b2v,
        woa=woa_p.astype(bf16), boa=boa_p, wov=wov_p.astype(bf16), bov=bov_p,
        seg=seg,
        meta=dict(levels=levels, bins=bins, atoms=atoms, actor_dim=D,
                  in_dim=in_dim, hidden_pad=hidden_pad, atoms_pad=atoms_pad,
                  head_w=head_w),
    )


# --------------------------------------------------------------------------
# Wrapper: C2FCritic.forward(low_dim_obs, None, action, None)
# --------------------------------------------------------------------------
def c2f_critic_forward(low_dim_obs, action, prepared, *, log_softmax=False):
    meta = prepared["meta"]
    levels, bins, atoms = meta["levels"], meta["bins"], meta["atoms"]
    D, in_dim = meta["actor_dim"], meta["in_dim"]
    hidden_pad, atoms_pad, head_w = meta["hidden_pad"], meta["atoms_pad"], meta["head_w"]

    low_dim_obs = low_dim_obs.astype(jnp.float32)
    action = action.astype(jnp.float32)
    bs = action.shape[0]
    low_dim = low_dim_obs.shape[-1]
    assert in_dim == low_dim + levels + D

    # ---- glue: encode_action + zoom_in trajectory (no net dependence) -----
    low = jnp.full((bs, D), -1.0, jnp.float32)            # initial_low
    high = jnp.full((bs, D), 1.0, jnp.float32)            # initial_high
    idx_levels, low_high_levels = [], []
    for _ in range(levels):
        low_high_levels.append((low + high) * 0.5)
        sr = (high - low) / bins
        idx = jnp.clip(jnp.floor((action - low) / sr), 0, bins - 1)
        idx_levels.append(idx)
        center = low + sr * (idx + 0.5)                   # zoom_in
        low, high = center - sr * 0.5, center + sr * 0.5
    idx_levels = jnp.stack(idx_levels, 0).astype(jnp.int32)      # (L, bs, D)
    low_high_levels = jnp.stack(low_high_levels, 0)              # (L, bs, D)

    # ---- glue: level-folded network input X of shape (M, in_dim) ----------
    eye = jnp.eye(levels, dtype=jnp.float32)
    lvl_feat = jnp.broadcast_to(eye[:, None, :], (levels, bs, levels))
    obs_feat = jnp.broadcast_to(low_dim_obs[None], (levels, bs, low_dim))
    M = levels * bs
    X = jnp.concatenate([obs_feat, lvl_feat, low_high_levels], -1)
    X = X.reshape(M, in_dim).astype(jnp.bfloat16)

    # pre-broadcast bin index to the padded head layout (column j -> d = j//atoms_pad)
    idx_flat = idx_levels.reshape(M, D)
    idx_rep = jnp.repeat(idx_flat, atoms_pad, axis=1)            # (M, D*atoms_pad)
    idx_rep = jnp.pad(idx_rep, ((0, 0), (0, head_w - D * atoms_pad)))

    # ---- batch tiling: >= 2 grid steps (v7x megacore), padded to block_m ---
    if M >= 512:
        block_m = 256
    else:
        block_m = max(16, _round_up(pl.cdiv(M, 2), 16))
    num_steps = max(2, pl.cdiv(M, block_m))
    M_pad = num_steps * block_m
    if M_pad != M:
        X = jnp.pad(X, ((0, M_pad - M), (0, 0)))
        idx_rep = jnp.pad(idx_rep, ((0, M_pad - M), (0, 0)))

    # ---- explicit scoped-VMEM budget (weights double-buffered + f32 temps) -
    def _nbytes(a):
        return int(a.size) * a.dtype.itemsize
    weight_bytes = sum(_nbytes(prepared[k]) for k in
                       ("w1", "b1", "w2a", "b2a", "w2v", "b2v",
                        "woa", "boa", "wov", "bov", "seg"))
    tile_bytes = block_m * (in_dim * 2 + head_w * 4 + head_w * 4)
    interm_bytes = block_m * 4 * (4 * hidden_pad + (bins + 6) * head_w)
    vmem_limit = int(min(64 << 20,                       # stay under v7x physical
                         max(32 << 20,
                             2 * (weight_bytes + tile_bytes) + interm_bytes + (8 << 20))))

    kernel = partial(_c2f_fused_kernel, hidden_pad=hidden_pad, bins=bins,
                     head_w=head_w, log_softmax=log_softmax)

    out = pl.pallas_call(
        kernel,
        grid=(num_steps,),
        in_specs=[
            pl.BlockSpec((block_m, in_dim), lambda i: (i, 0)),            # X
            pl.BlockSpec((in_dim, 2 * hidden_pad), lambda i: (0, 0)),     # w1 (fused)
            pl.BlockSpec((1, 2 * hidden_pad), lambda i: (0, 0)),          # b1 (fused)
            pl.BlockSpec((hidden_pad, hidden_pad), lambda i: (0, 0)),     # w2a
            pl.BlockSpec((1, hidden_pad), lambda i: (0, 0)),              # b2a
            pl.BlockSpec((hidden_pad, hidden_pad), lambda i: (0, 0)),     # w2v
            pl.BlockSpec((1, hidden_pad), lambda i: (0, 0)),              # b2v
            pl.BlockSpec((hidden_pad, bins * head_w), lambda i: (0, 0)),  # woa (centered)
            pl.BlockSpec((1, bins * head_w), lambda i: (0, 0)),           # boa
            pl.BlockSpec((hidden_pad, head_w), lambda i: (0, 0)),         # wov
            pl.BlockSpec((1, head_w), lambda i: (0, 0)),                  # bov
            pl.BlockSpec((head_w, head_w), lambda i: (0, 0)),             # seg-sum ones
            pl.BlockSpec((block_m, head_w), lambda i: (i, 0)),            # idx_rep
        ],
        out_specs=pl.BlockSpec((block_m, head_w), lambda i: (i, 0)),
        out_shape=jax.ShapeDtypeStruct((M_pad, head_w), jnp.float32),
        compiler_params=pltpu.CompilerParams(
            dimension_semantics=("parallel",),
            vmem_limit_bytes=vmem_limit),
    )(X, prepared["w1"], prepared["b1"], prepared["w2a"], prepared["b2a"],
      prepared["w2v"], prepared["b2v"], prepared["woa"], prepared["boa"],
      prepared["wov"], prepared["bov"], prepared["seg"], idx_rep)

    # ---- glue: strip padding, (L*bs, D*atoms_pad) -> torch.stack(outs,-3) --
    out = out[:M, :D * atoms_pad].reshape(levels, bs, D, atoms_pad)[..., :atoms]
    return out.transpose(1, 0, 2, 3)                              # (bs, L, D, atoms)


# --------------------------------------------------------------------------
# Pure-JAX f32 reference (mirrors the PyTorch forward) for correctness check.
# --------------------------------------------------------------------------
def reference_forward(low_dim_obs, action, params, *, levels, bins, atoms,
                      log_softmax=False):
    bs, D = action.shape
    lo = -jnp.ones((bs, D), jnp.float32)
    hi = jnp.ones((bs, D), jnp.float32)

    # encode_action
    elo, ehi, idxs = lo, hi, []
    for _ in range(levels):
        sr = (ehi - elo) / bins
        idx = jnp.clip(jnp.floor((action - elo) / sr), 0, bins - 1)
        idxs.append(idx)
        c = elo + sr * (idx + 0.5)
        elo, ehi = c - sr / 2.0, c + sr / 2.0
    discrete = jnp.stack(idxs, axis=-2)                       # (bs, L, D)

    outs = []
    for level in range(levels):
        lvl = jnp.broadcast_to(jnp.eye(levels, dtype=jnp.float32)[level][None],
                               (bs, levels))
        x = jnp.concatenate([low_dim_obs, lvl, (lo + hi) / 2.0], -1)
        ha = jax.nn.relu(x @ params["w1a"] + params["b1a"])
        ha = jax.nn.relu(ha @ params["w2a"] + params["b2a"])
        adv = (ha @ params["woa"] + params["boa"]).reshape(bs, D, bins, atoms)
        hv = jax.nn.relu(x @ params["w1v"] + params["b1v"])
        hv = jax.nn.relu(hv @ params["w2v"] + params["b2v"])
        val = (hv @ params["wov"] + params["bov"]).reshape(bs, D, 1, atoms)
        q_logits = val + adv - adv.mean(axis=-2, keepdims=True)
        q = (jax.nn.log_softmax(q_logits, -1) if log_softmax
             else jax.nn.softmax(q_logits, -1))
        am = discrete[:, level, :].astype(jnp.int32)
        q_a = jnp.take_along_axis(q, am[:, :, None, None], axis=-2)[..., 0, :]
        outs.append(q_a)
        # zoom_in
        sr = (hi - lo) / bins
        c = lo + sr * (am.astype(jnp.float32) + 0.5)
        lo, hi = c - sr / 2.0, c + sr / 2.0
    return jnp.stack(outs, axis=-3)                            # (bs, L, D, A)


if __name__ == "__main__":
    key = jax.random.PRNGKey(0)
    bs, actor_dim, levels, bins, atoms = 2, 3, 3, 4, 16
    low_dim, hidden = 10, 32
    in_dim = low_dim + levels + actor_dim

    keys = jax.random.split(key, 16)

    def w(k, shape, scale=0.1):
        return jax.random.normal(k, shape, jnp.float32) * scale

    # NOTE: the reference module zero-inits its output layers
    # (utils.uniform_weight_init(0.0)); we use small random weights so the
    # numeric check is non-trivial.
    params = {
        "w1a": w(keys[0], (in_dim, hidden)), "b1a": w(keys[1], (1, hidden)),
        "w2a": w(keys[2], (hidden, hidden)), "b2a": w(keys[3], (1, hidden)),
        "woa": w(keys[4], (hidden, actor_dim * bins * atoms)),
        "boa": w(keys[5], (1, actor_dim * bins * atoms)),
        "w1v": w(keys[6], (in_dim, hidden)), "b1v": w(keys[7], (1, hidden)),
        "w2v": w(keys[8], (hidden, hidden)), "b2v": w(keys[9], (1, hidden)),
        "wov": w(keys[10], (hidden, actor_dim * atoms)),
        "bov": w(keys[11], (1, actor_dim * atoms)),
    }
    low_dim_obs = jax.random.normal(keys[12], (bs, low_dim), jnp.float32)
    action = jax.random.uniform(keys[13], (bs, actor_dim), jnp.float32,
                                minval=-1.0, maxval=1.0)

    # one-time weight prep (bin-mean folding, bin-major padded layout, bf16 casts)
    prepared = prepare_c2f_params(params, levels=levels, bins=bins,
                                  atoms=atoms, actor_dim=actor_dim)

    out = c2f_critic_forward(low_dim_obs, action, prepared)
    out = jax.block_until_ready(out)

    ref = reference_forward(low_dim_obs, action, params,
                            levels=levels, bins=bins, atoms=atoms)
    # kernel feeds the MXU bf16 operands (f32 accumulate) and uses an approx
    # reciprocal for the softmax denominator -> compare against the f32
    # reference with tolerances comfortably above that error floor.
    np.testing.assert_allclose(np.asarray(out), np.asarray(ref),
                               rtol=5e-2, atol=5e-3)
    assert out.shape == (bs, levels, actor_dim, atoms)
    print("KERNEL_OK")
</pallas_src>

<mosaic_0001>
module attributes {stable_mosaic.version = 11 : i64} {
  func.func @_c2f_fused_kernel(%arg0: i32, %arg1: memref<16x16xbf16, #tpu.memory_space<vmem>>, %arg2: memref<16x256xbf16, #tpu.memory_space<vmem>>, %arg3: memref<1x256xf32, #tpu.memory_space<vmem>>, %arg4: memref<128x128xbf16, #tpu.memory_space<vmem>>, %arg5: memref<1x128xf32, #tpu.memory_space<vmem>>, %arg6: memref<128x128xbf16, #tpu.memory_space<vmem>>, %arg7: memref<1x128xf32, #tpu.memory_space<vmem>>, %arg8: memref<128x512xbf16, #tpu.memory_space<vmem>>, %arg9: memref<1x512xf32, #tpu.memory_space<vmem>>, %arg10: memref<128x128xbf16, #tpu.memory_space<vmem>>, %arg11: memref<1x128xf32, #tpu.memory_space<vmem>>, %arg12: memref<128x128xf32, #tpu.memory_space<vmem>>, %arg13: memref<16x128xi32, #tpu.memory_space<vmem>>, %arg14: memref<16x128xf32, #tpu.memory_space<vmem>>) attributes {dimension_semantics = [#tpu.dimension_semantics<parallel>], iteration_bounds = array<i64: 2>, scalar_prefetch = 0 : i64, scratch_operands = 0 : i64, tpu.core_type = #tpu.core_type<tc>, window_params = [{transform_indices = @transform_0, window_bounds = array<i64: 16, 16>}, {pipeline_mode = #tpu.pipeline_mode<synchronous>, transform_indices = @transform_1, window_bounds = array<i64: 16, 256>}, {pipeline_mode = #tpu.pipeline_mode<synchronous>, transform_indices = @transform_2, window_bounds = array<i64: 1, 256>}, {pipeline_mode = #tpu.pipeline_mode<synchronous>, transform_indices = @transform_3, window_bounds = array<i64: 128, 128>}, {pipeline_mode = #tpu.pipeline_mode<synchronous>, transform_indices = @transform_4, window_bounds = array<i64: 1, 128>}, {pipeline_mode = #tpu.pipeline_mode<synchronous>, transform_indices = @transform_5, window_bounds = array<i64: 128, 128>}, {pipeline_mode = #tpu.pipeline_mode<synchronous>, transform_indices = @transform_6, window_bounds = array<i64: 1, 128>}, {pipeline_mode = #tpu.pipeline_mode<synchronous>, transform_indices = @transform_7, window_bounds = array<i64: 128, 512>}, {pipeline_mode = #tpu.pipeline_mode<synchronous>, transform_indices = @transform_8, window_bounds = array<i64: 1, 512>}, {pipeline_mode = #tpu.pipeline_mode<synchronous>, transform_indices = @transform_9, window_bounds = array<i64: 128, 128>}, {pipeline_mode = #tpu.pipeline_mode<synchronous>, transform_indices = @transform_10, window_bounds = array<i64: 1, 128>}, {pipeline_mode = #tpu.pipeline_mode<synchronous>, transform_indices = @transform_11, window_bounds = array<i64: 128, 128>}, {transform_indices = @transform_12, window_bounds = array<i64: 16, 128>}, {transform_indices = @transform_13, window_bounds = array<i64: 16, 128>}]} {
    %c0 = arith.constant 0 : index
    %c0_0 = arith.constant 0 : index
    %0 = vector.load %arg1[%c0, %c0_0] : memref<16x16xbf16, #tpu.memory_space<vmem>>, vector<16x16xbf16>
    %c0_1 = arith.constant 0 : index
    %c0_2 = arith.constant 0 : index
    %1 = vector.load %arg2[%c0_1, %c0_2] : memref<16x256xbf16, #tpu.memory_space<vmem>>, vector<16x256xbf16>
    %cst = arith.constant dense<0.000000e+00> : vector<16x256xf32>
    %2 = tpu.matmul %0, %1, %cst {dimension_numbers = #tpu.dot_dimension_numbers<[1], [0], [0], [1], [0, 0, 1, 1], [], []>} : vector<16x16xbf16>, vector<16x256xbf16>, vector<16x256xf32> -> vector<16x256xf32>
    %c0_3 = arith.constant 0 : index
    %c0_4 = arith.constant 0 : index
    %3 = vector.load %arg3[%c0_3, %c0_4] : memref<1x256xf32, #tpu.memory_space<vmem>>, vector<1x256xf32>
    %4 = vector.broadcast %3 : vector<1x256xf32> to vector<16x256xf32>
    %5 = arith.addf %2, %4 : vector<16x256xf32>
    %cst_5 = arith.constant 0.000000e+00 : f32
    %6 = vector.broadcast %cst_5 : f32 to vector<16x256xf32>
    %7 = arith.maximumf %5, %6 : vector<16x256xf32>
    %8 = vector.extract_strided_slice %7 {offsets = [0, 0], sizes = [16, 128], strides = [1, 1]} : vector<16x256xf32> to vector<16x128xf32>
    %9 = arith.truncf %8 : vector<16x128xf32> to vector<16x128xbf16>
    %10 = vector.extract_strided_slice %7 {offsets = [0, 128], sizes = [16, 128], strides = [1, 1]} : vector<16x256xf32> to vector<16x128xf32>
    %11 = arith.truncf %10 : vector<16x128xf32> to vector<16x128xbf16>
    %c0_6 = arith.constant 0 : index
    %c0_7 = arith.constant 0 : index
    %12 = vector.load %arg4[%c0_6, %c0_7] : memref<128x128xbf16, #tpu.memory_space<vmem>>, vector<128x128xbf16>
    %cst_8 = arith.constant dense<0.000000e+00> : vector<16x128xf32>
    %13 = tpu.matmul %9, %12, %cst_8 {dimension_numbers = #tpu.dot_dimension_numbers<[1], [0], [0], [1], [0, 0, 1, 1], [], []>} : vector<16x128xbf16>, vector<128x128xbf16>, vector<16x128xf32> -> vector<16x128xf32>
    %c0_9 = arith.constant 0 : index
    %c0_10 = arith.constant 0 : index
    %14 = vector.load %arg5[%c0_9, %c0_10] : memref<1x128xf32, #tpu.memory_space<vmem>>, vector<1x128xf32>
    %15 = vector.broadcast %14 : vector<1x128xf32> to vector<16x128xf32>
    %16 = arith.addf %13, %15 : vector<16x128xf32>
    %cst_11 = arith.constant 0.000000e+00 : f32
    %17 = vector.broadcast %cst_11 : f32 to vector<16x128xf32>
    %18 = arith.maximumf %16, %17 : vector<16x128xf32>
    %19 = arith.truncf %18 : vector<16x128xf32> to vector<16x128xbf16>
    %c0_12 = arith.constant 0 : index
    %c0_13 = arith.constant 0 : index
    %20 = vector.load %arg6[%c0_12, %c0_13] : memref<128x128xbf16, #tpu.memory_space<vmem>>, vector<128x128xbf16>
    %cst_14 = arith.constant dense<0.000000e+00> : vector<16x128xf32>
    %21 = tpu.matmul %11, %20, %cst_14 {dimension_numbers = #tpu.dot_dimension_numbers<[1], [0], [0], [1], [0, 0, 1, 1], [], []>} : vector<16x128xbf16>, vector<128x128xbf16>, vector<16x128xf32> -> vector<16x128xf32>
    %c0_15 = arith.constant 0 : index
    %c0_16 = arith.constant 0 : index
    %22 = vector.load %arg7[%c0_15, %c0_16] : memref<1x128xf32, #tpu.memory_space<vmem>>, vector<1x128xf32>
    %23 = vector.broadcast %22 : vector<1x128xf32> to vector<16x128xf32>
    %24 = arith.addf %21, %23 : vector<16x128xf32>
    %cst_17 = arith.constant 0.000000e+00 : f32
    %25 = vector.broadcast %cst_17 : f32 to vector<16x128xf32>
    %26 = arith.maximumf %24, %25 : vector<16x128xf32>
    %27 = arith.truncf %26 : vector<16x128xf32> to vector<16x128xbf16>
    %c0_18 = arith.constant 0 : index
    %c0_19 = arith.constant 0 : index
    %28 = vector.load %arg8[%c0_18, %c0_19] : memref<128x512xbf16, #tpu.memory_space<vmem>>, vector<128x512xbf16>
    %cst_20 = arith.constant dense<0.000000e+00> : vector<16x512xf32>
    %29 = tpu.matmul %19, %28, %cst_20 {dimension_numbers = #tpu.dot_dimension_numbers<[1], [0], [0], [1], [0, 0, 1, 1], [], []>} : vector<16x128xbf16>, vector<128x512xbf16>, vector<16x512xf32> -> vector<16x512xf32>
    %c0_21 = arith.constant 0 : index
    %c0_22 = arith.constant 0 : index
    %30 = vector.load %arg9[%c0_21, %c0_22] : memref<1x512xf32, #tpu.memory_space<vmem>>, vector<1x512xf32>
    %31 = vector.broadcast %30 : vector<1x512xf32> to vector<16x512xf32>
    %32 = arith.addf %29, %31 : vector<16x512xf32>
    %c0_23 = arith.constant 0 : index
    %c0_24 = arith.constant 0 : index
    %33 = vector.load %arg10[%c0_23, %c0_24] : memref<128x128xbf16, #tpu.memory_space<vmem>>, vector<128x128xbf16>
    %cst_25 = arith.constant dense<0.000000e+00> : vector<16x128xf32>
    %34 = tpu.matmul %27, %33, %cst_25 {dimension_numbers = #tpu.dot_dimension_numbers<[1], [0], [0], [1], [0, 0, 1, 1], [], []>} : vector<16x128xbf16>, vector<128x128xbf16>, vector<16x128xf32> -> vector<16x128xf32>
    %c0_26 = arith.constant 0 : index
    %c0_27 = arith.constant 0 : index
    %35 = vector.load %arg11[%c0_26, %c0_27] : memref<1x128xf32, #tpu.memory_space<vmem>>, vector<1x128xf32>
    %36 = vector.broadcast %35 : vector<1x128xf32> to vector<16x128xf32>
    %37 = arith.addf %34, %36 : vector<16x128xf32>
    %c0_28 = arith.constant 0 : index
    %c0_29 = arith.constant 0 : index
    %38 = vector.load %arg13[%c0_28, %c0_29] : memref<16x128xi32, #tpu.memory_space<vmem>>, vector<16x128xi32>
    %cst_30 = arith.constant 0.000000e+00 : f32
    %39 = vector.broadcast %cst_30 : f32 to vector<16x128xf32>
    %c0_i32 = arith.constant 0 : i32
    %40 = vector.broadcast %c0_i32 : i32 to vector<16x128xi32>
    %41 = arith.cmpi eq, %38, %40 : vector<16x128xi32>
    %42 = vector.extract_strided_slice %32 {offsets = [0, 0], sizes = [16, 128], strides = [1, 1]} : vector<16x512xf32> to vector<16x128xf32>
    %cst_31 = arith.constant 0.000000e+00 : f32
    %43 = vector.broadcast %cst_31 : f32 to vector<16x128xf32>
    %44 = arith.select %41, %42, %43 : vector<16x128xi1>, vector<16x128xf32>
    %45 = arith.addf %39, %44 : vector<16x128xf32>
    %c1_i32 = arith.constant 1 : i32
    %46 = vector.broadcast %c1_i32 : i32 to vector<16x128xi32>
    %47 = arith.cmpi eq, %38, %46 : vector<16x128xi32>
    %48 = vector.extract_strided_slice %32 {offsets = [0, 128], sizes = [16, 128], strides = [1, 1]} : vector<16x512xf32> to vector<16x128xf32>
    %cst_32 = arith.constant 0.000000e+00 : f32
    %49 = vector.broadcast %cst_32 : f32 to vector<16x128xf32>
    %50 = arith.select %47, %48, %49 : vector<16x128xi1>, vector<16x128xf32>
    %51 = arith.addf %45, %50 : vector<16x128xf32>
    %c2_i32 = arith.constant 2 : i32
    %52 = vector.broadcast %c2_i32 : i32 to vector<16x128xi32>
    %53 = arith.cmpi eq, %38, %52 : vector<16x128xi32>
    %54 = vector.extract_strided_slice %32 {offsets = [0, 256], sizes = [16, 128], strides = [1, 1]} : vector<16x512xf32> to vector<16x128xf32>
    %cst_33 = arith.constant 0.000000e+00 : f32
    %55 = vector.broadcast %cst_33 : f32 to vector<16x128xf32>
    %56 = arith.select %53, %54, %55 : vector<16x128xi1>, vector<16x128xf32>
    %57 = arith.addf %51, %56 : vector<16x128xf32>
    %c3_i32 = arith.constant 3 : i32
    %58 = vector.broadcast %c3_i32 : i32 to vector<16x128xi32>
    %59 = arith.cmpi eq, %38, %58 : vector<16x128xi32>
    %60 = vector.extract_strided_slice %32 {offsets = [0, 384], sizes = [16, 128], strides = [1, 1]} : vector<16x512xf32> to vector<16x128xf32>
    %cst_34 = arith.constant 0.000000e+00 : f32
    %61 = vector.broadcast %cst_34 : f32 to vector<16x128xf32>
    %62 = arith.select %59, %60, %61 : vector<16x128xi1>, vector<16x128xf32>
    %63 = arith.addf %57, %62 : vector<16x128xf32>
    %64 = arith.addf %37, %63 : vector<16x128xf32>
    %cst_35 = arith.constant dense<0xFF800000> : vector<16xf32>
    %65 = vector.multi_reduction <maximumf>, %64, %cst_35 [1] : vector<16x128xf32> to vector<16xf32>
    %66 = vector.shape_cast %65 : vector<16xf32> to vector<16x1xf32>
    %67 = vector.broadcast %66 : vector<16x1xf32> to vector<16x128xf32>
    %68 = arith.subf %64, %67 : vector<16x128xf32>
    %69 = math.exp %68 : vector<16x128xf32>
    %c0_36 = arith.constant 0 : index
    %c0_37 = arith.constant 0 : index
    %70 = vector.load %arg12[%c0_36, %c0_37] : memref<128x128xf32, #tpu.memory_space<vmem>>, vector<128x128xf32>
    %cst_38 = arith.constant dense<0.000000e+00> : vector<16x128xf32>
    %71 = tpu.matmul %69, %70, %cst_38 {dimension_numbers = #tpu.dot_dimension_numbers<[1], [0], [0], [1], [0, 0, 1, 1], [], []>} : vector<16x128xf32>, vector<128x128xf32>, vector<16x128xf32> -> vector<16x128xf32>
    %72 = tpu.reciprocal %71 {approx = true} : vector<16x128xf32> -> vector<16x128xf32>
    %73 = arith.mulf %69, %72 : vector<16x128xf32>
    %c0_39 = arith.constant 0 : index
    %c0_40 = arith.constant 0 : index
    %74 = vector.load %arg14[%c0_39, %c0_40] : memref<16x128xf32, #tpu.memory_space<vmem>>, vector<16x128xf32>
    tpu.vector_store %arg14[%c0_39, %c0_40], %73 {strides = array<i32>} : memref<16x128xf32, #tpu.memory_space<vmem>>, vector<16x128xf32>,
    return
  }
  func.func @transform_0(%arg0: i32) -> (i32, i32) {
    %c0_i32 = arith.constant 0 : i32
    %c0_i32_0 = arith.constant 0 : i32
    return %arg0, %c0_i32 : i32, i32
  }
  func.func @transform_1(%arg0: i32) -> (i32, i32) {
    %c0_i32 = arith.constant 0 : i32
    %c0_i32_0 = arith.constant 0 : i32
    %c0_i32_1 = arith.constant 0 : i32
    return %c0_i32, %c0_i32_0 : i32, i32
  }
  func.func @transform_2(%arg0: i32) -> (i32, i32) {
    %c0_i32 = arith.constant 0 : i32
    %c0_i32_0 = arith.constant 0 : i32
    %c0_i32_1 = arith.constant 0 : i32
    return %c0_i32, %c0_i32_0 : i32, i32
  }
  func.func @transform_3(%arg0: i32) -> (i32, i32) {
    %c0_i32 = arith.constant 0 : i32
    %c0_i32_0 = arith.constant 0 : i32
    %c0_i32_1 = arith.constant 0 : i32
    return %c0_i32, %c0_i32_0 : i32, i32
  }
  func.func @transform_4(%arg0: i32) -> (i32, i32) {
    %c0_i32 = arith.constant 0 : i32
    %c0_i32_0 = arith.constant 0 : i32
    %c0_i32_1 = arith.constant 0 : i32
    return %c0_i32, %c0_i32_0 : i32, i32
  }
  func.func @transform_5(%arg0: i32) -> (i32, i32) {
    %c0_i32 = arith.constant 0 : i32
    %c0_i32_0 = arith.constant 0 : i32
    %c0_i32_1 = arith.constant 0 : i32
    return %c0_i32, %c0_i32_0 : i32, i32
  }
  func.func @transform_6(%arg0: i32) -> (i32, i32) {
    %c0_i32 = arith.constant 0 : i32
    %c0_i32_0 = arith.constant 0 : i32
    %c0_i32_1 = arith.constant 0 : i32
    return %c0_i32, %c0_i32_0 : i32, i32
  }
  func.func @transform_7(%arg0: i32) -> (i32, i32) {
    %c0_i32 = arith.constant 0 : i32
    %c0_i32_0 = arith.constant 0 : i32
    %c0_i32_1 = arith.constant 0 : i32
    return %c0_i32, %c0_i32_0 : i32, i32
  }
  func.func @transform_8(%arg0: i32) -> (i32, i32) {
    %c0_i32 = arith.constant 0 : i32
    %c0_i32_0 = arith.constant 0 : i32
    %c0_i32_1 = arith.constant 0 : i32
    return %c0_i32, %c0_i32_0 : i32, i32
  }
  func.func @transform_9(%arg0: i32) -> (i32, i32) {
    %c0_i32 = arith.constant 0 : i32
    %c0_i32_0 = arith.constant 0 : i32
    %c0_i32_1 = arith.constant 0 : i32
    return %c0_i32, %c0_i32_0 : i32, i32
  }
  func.func @transform_10(%arg0: i32) -> (i32, i32) {
    %c0_i32 = arith.constant 0 : i32
    %c0_i32_0 = arith.constant 0 : i32
    %c0_i32_1 = arith.constant 0 : i32
    return %c0_i32, %c0_i32_0 : i32, i32
  }
  func.func @transform_11(%arg0: i32) -> (i32, i32) {
    %c0_i32 = arith.constant 0 : i32
    %c0_i32_0 = arith.constant 0 : i32
    %c0_i32_1 = arith.constant 0 : i32
    return %c0_i32, %c0_i32_0 : i32, i32
  }
  func.func @transform_12(%arg0: i32) -> (i32, i32) {
    %c0_i32 = arith.constant 0 : i32
    %c0_i32_0 = arith.constant 0 : i32
    return %arg0, %c0_i32 : i32, i32
  }
  func.func @transform_13(%arg0: i32) -> (i32, i32) {
    %c0_i32 = arith.constant 0 : i32
    %c0_i32_0 = arith.constant 0 : i32
    return %arg0, %c0_i32 : i32, i32
  }
}

</mosaic_0001>

<llo_original>
// kernel: tpu_custom_call.1
$region0: #{tpu_custom_call.1}
  #allocation0 [shape = 'u32[]', space=smem, size = 0x4, offset = 0x4, fixed_abs, tag = 'smem constant byte address 0x4 - core index']
  #allocation1 [shape = 'u32[144,128]{1,0:T(1,128)}', space=vmem, size = 0x12000, scoped, tag = 'internal scratch']
  %s0 = inlined_call_operand.vmem [shape: bf16[32,16], index: 0, kind: input, shape index: {}]
  %s1 = inlined_call_operand.hbm [shape: bf16[16,256], index: 1, kind: input, shape index: {}]
  %s2 = inlined_call_operand.vmem [shape: f32[1,256], index: 2, kind: input, shape index: {}]
  %s3 = inlined_call_operand.hbm [shape: bf16[128,128], index: 3, kind: input, shape index: {}]
  %s4 = inlined_call_operand.vmem [shape: f32[1,128], index: 4, kind: input, shape index: {}]
  %s5 = inlined_call_operand.hbm [shape: bf16[128,128], index: 5, kind: input, shape index: {}]
  %s6 = inlined_call_operand.vmem [shape: f32[1,128], index: 6, kind: input, shape index: {}]
  %s7 = inlined_call_operand.hbm [shape: bf16[128,512], index: 7, kind: input, shape index: {}]
  %s8 = inlined_call_operand.vmem [shape: f32[1,512], index: 8, kind: input, shape index: {}]
  %s9 = inlined_call_operand.hbm [shape: bf16[128,128], index: 9, kind: input, shape index: {}]
  %s10 = inlined_call_operand.vmem [shape: f32[1,128], index: 10, kind: input, shape index: {}]
  %s11 = inlined_call_operand.hbm [shape: f32[128,128], index: 11, kind: input, shape index: {}]
  %s12 = inlined_call_operand.vmem [shape: s32[32,128], index: 12, kind: input, shape index: {}]
  %s13 = inlined_call_operand.hbm [shape: f32[32,128], index: 13, kind: output, shape index: {}]
  %s14 = sld [smem:[#allocation0]]
  $region109: #{tpu_custom_call.1} parent=0
    _
  %s16 = ssub.s32 1, %s14
  %s17 = scalar_select 0, %s16, %s14
  $region1: #{tpu_custom_call.1} parent=0
    #allocation2 [shape = 'u8[8192]{0}', space=vmem, size = 0x2000, scoped, tag = 'input window, operand 1, single buffered']
    #allocation3 [shape = 's32[2]{0}', space=sflag, size = 0x8, scoped, tag = 'scoped memory for tpu_custom_call.1']
    #allocation4 [shape = 's32[2]{0}', space=sflag, size = 0x8, scoped, tag = 'scoped memory for tpu_custom_call.1']
    #allocation5 [shape = 'u8[32768]{0}', space=vmem, size = 0x8000, scoped, tag = 'input window, operand 3, single buffered']
    #allocation6 [shape = 's32[1]{0}', space=sflag, size = 0x4, scoped, tag = 'scoped memory for tpu_custom_call.1']
    #allocation7 [shape = 'u8[32768]{0}', space=vmem, size = 0x8000, scoped, tag = 'input window, operand 5, single buffered']
    #allocation8 [shape = 'u8[131072]{0}', space=vmem, size = 0x20000, scoped, tag = 'input window, operand 7, single buffered']
    #allocation9 [shape = 's32[1]{0}', space=sflag, size = 0x4, scoped, tag = 'scoped memory for tpu_custom_call.1']
    #allocation10 [shape = 'u8[32768]{0}', space=vmem, size = 0x8000, scoped, tag = 'input window, operand 9, single buffered']
    #allocation11 [shape = 'u8[65536]{0}', space=vmem, size = 0x10000, scoped, tag = 'input window, operand 11, single buffered']
    #allocation12 [shape = 's32[1]{0}', space=sflag, size = 0x4, scoped, tag = 'scoped memory for tpu_custom_call.1']
    #allocation13 [shape = 'u8[16384]{0}', space=vmem, size = 0x4000, scoped, tag = 'output window, operand 0']
    %18 = vsyncpa [#allocation3], 0
    %19 = vsyncpa [#allocation6], 0
    %20 = vsyncpa [#allocation9], 0
    %21 = vsyncpa [#allocation12], 0
    %22 = vsyncpa [#allocation4], 0
    %s23 = scalar_lea.sflag [#allocation4], 1
    %24 = vsyncpa %s23, 0
    loop: start=0, step=1, limit=4
    $region2: #{tpu_custom_call.1} parent=1 // loop_pre_header
      _
    $region3: #{tpu_custom_call.1} parent=1 // loop_header
      %s26 = sphi 0, %s30
      %p27 = scmp.ge.s32.totalorder %s26, 4
      %s36 = sphi 0, %s38
      %s39 = sphi 0, %s36
      %s40 = sphi 0, %s39
      %s56 = sphi 0, %s40
      %s60 = sphi 0, %s60
      %s62 = sphi 0, %s60
      %s63 = sphi 0, %s62
      %s77 = sphi 0, %s63
      %s81 = sphi 0, %s81
      %s83 = sphi 0, %s81
      %s84 = sphi 0, %s83
      %s98 = sphi 0, %s84
      %s102 = sphi 0, %s102
      %s104 = sphi 0, %s102
      %s105 = sphi 0, %s104
      %s119 = sphi 0, %s105
      %s123 = sphi 0, %s123
      %s125 = sphi 0, %s123
      %s126 = sphi 0, %s125
      %s140 = sphi 0, %s126
      %s144 = sphi 0, %s144
      %s146 = sphi 0, %s144
      %s147 = sphi 0, %s146
      %s161 = sphi 0, %s147
      %s165 = sphi 0, %s165
      %s167 = sphi 0, %s165
      %s168 = sphi 0, %s167
      %s182 = sphi 0, %s168
      %s186 = sphi 0, %s186
      %s188 = sphi 0, %s186
      %s189 = sphi 0, %s188
      %s203 = sphi 0, %s189
      %s207 = sphi 0, %s207
      %s209 = sphi 0, %s207
      %s210 = sphi 0, %s209
      %s224 = sphi 0, %s210
      %s228 = sphi 0, %s228
      %s230 = sphi 0, %s228
      %s231 = sphi 0, %s230
      %s245 = sphi 0, %s231
      %s249 = sphi 0, %s249
      %s251 = sphi 0, %s249
      %s252 = sphi 0, %s251
      %s266 = sphi 0, %s252
      %s270 = sphi 0, %s270
      %s272 = sphi 0, %s270
      %s273 = sphi 0, %s272
      %s287 = sphi 0, %s273
      %s293 = sphi 0, %s295
      %s296 = sphi 0, %s293
      %s297 = sphi 0, %s296
      %s313 = sphi 0, %s297
      %s319 = sphi 0, %s321
      %s322 = sphi 0, %s319
      %s323 = sphi 0, %s322
      %s339 = sphi 0, %s323
    $region4: #{tpu_custom_call.1} parent=1 // loop_header_branch
      %29 = sbr.rel (%p27) target = $region8
    $region5: #{tpu_custom_call.1} parent=1 // loop_body
      %s31 = ssub.s32 %s26, 1
      %s32 = ssub.s32 %s26, 2
      %s33 = sadd.s32 %s26, 1
      %s34 = ssub.s32 %s26, %s33
      %p35 = scmp.eq.s32.totalorder %s34, 0
      %s37 = sadd.s32 %s36, 1
      %s38 = scalar_select %p35, %s36, %s37
      %p41 = pneg %p35
      %p42 = scmp.eq.s32.totalorder %s26, 1
      %p43 = por %p41, %p42
      %p44 = scmp.ne.s32.totalorder %s36, %s39
      %p45 = scmp.eq.s32.totalorder %s26, 0
      %p46 = por %p44, %p45
      %p47 = scmp.ne.s32.totalorder %s36, %s39
      %p48 = scmp.eq.s32.totalorder %s31, 1
      %p49 = por %p47, %p48
      %p50 = scmp.ne.s32.totalorder %s39, %s40
      %p51 = scmp.eq.s32.totalorder %s31, 0
      %p52 = por %p50, %p51
      %p53 = scmp.ne.s32.totalorder %s39, %s40
      %p54 = scmp.eq.s32.totalorder %s32, 1
      %p55 = por %p53, %p54
      %p57 = scmp.ne.s32.totalorder %s40, %s56
      %p58 = scmp.eq.s32.totalorder %s32, 0
      %p59 = por %p57, %p58
      %s61 = sadd.s32 %s60, 1
      %p64 = scmp.eq.s32.totalorder %s26, 1
      %p65 = scmp.ne.s32.totalorder %s60, %s62
      %p66 = scmp.eq.s32.totalorder %s26, 0
      %p67 = por %p65, %p66
      %p68 = scmp.ne.s32.totalorder %s60, %s62
      %p69 = scmp.eq.s32.totalorder %s31, 1
      %p70 = por %p68, %p69
      %p71 = scmp.ne.s32.totalorder %s62, %s63
      %p72 = scmp.eq.s32.totalorder %s31, 0
      %p73 = por %p71, %p72
      %p74 = scmp.ne.s32.totalorder %s62, %s63
      %p75 = scmp.eq.s32.totalorder %s32, 1
      %p76 = por %p74, %p75
      %p78 = scmp.ne.s32.totalorder %s63, %s77
      %p79 = scmp.eq.s32.totalorder %s32, 0
      %p80 = por %p78, %p79
      %s82 = sadd.s32 %s81, 1
      %p85 = scmp.eq.s32.totalorder %s26, 1
      %p86 = scmp.ne.s32.totalorder %s81, %s83
      %p87 = scmp.eq.s32.totalorder %s26, 0
      %p88 = por %p86, %p87
      %p89 = scmp.ne.s32.totalorder %s81, %s83
      %p90 = scmp.eq.s32.totalorder %s31, 1
      %p91 = por %p89, %p90
      %p92 = scmp.ne.s32.totalorder %s83, %s84
      %p93 = scmp.eq.s32.totalorder %s31, 0
      %p94 = por %p92, %p93
      %p95 = scmp.ne.s32.totalorder %s83, %s84
      %p96 = scmp.eq.s32.totalorder %s32, 1
      %p97 = por %p95, %p96
      %p99 = scmp.ne.s32.totalorder %s84, %s98
      %p100 = scmp.eq.s32.totalorder %s32, 0
      %p101 = por %p99, %p100
      %s103 = sadd.s32 %s102, 1
      %p106 = scmp.eq.s32.totalorder %s26, 1
      %p107 = scmp.ne.s32.totalorder %s102, %s104
      %p108 = scmp.eq.s32.totalorder %s26, 0
      %p109 = por %p107, %p108
      %p110 = scmp.ne.s32.totalorder %s102, %s104
      %p111 = scmp.eq.s32.totalorder %s31, 1
      %p112 = por %p110, %p111
      %p113 = scmp.ne.s32.totalorder %s104, %s105
      %p114 = scmp.eq.s32.totalorder %s31, 0
      %p115 = por %p113, %p114
      %p116 = scmp.ne.s32.totalorder %s104, %s105
      %p117 = scmp.eq.s32.totalorder %s32, 1
      %p118 = por %p116, %p117
      %p120 = scmp.ne.s32.totalorder %s105, %s119
      %p121 = scmp.eq.s32.totalorder %s32, 0
      %p122 = por %p120, %p121
      %s124 = sadd.s32 %s123, 1
      %p127 = scmp.eq.s32.totalorder %s26, 1
      %p128 = scmp.ne.s32.totalorder %s123, %s125
      %p129 = scmp.eq.s32.totalorder %s26, 0
      %p130 = por %p128, %p129
      %p131 = scmp.ne.s32.totalorder %s123, %s125
      %p132 = scmp.eq.s32.totalorder %s31, 1
      %p133 = por %p131, %p132
      %p134 = scmp.ne.s32.totalorder %s125, %s126
      %p135 = scmp.eq.s32.totalorder %s31, 0
      %p136 = por %p134, %p135
      %p137 = scmp.ne.s32.totalorder %s125, %s126
      %p138 = scmp.eq.s32.totalorder %s32, 1
      %p139 = por %p137, %p138
      %p141 = scmp.ne.s32.totalorder %s126, %s140
      %p142 = scmp.eq.s32.totalorder %s32, 0
      %p143 = por %p141, %p142
      %s145 = sadd.s32 %s144, 1
      %p148 = scmp.eq.s32.totalorder %s26, 1
      %p149 = scmp.ne.s32.totalorder %s144, %s146
      %p150 = scmp.eq.s32.totalorder %s26, 0
      %p151 = por %p149, %p150
      %p152 = scmp.ne.s32.totalorder %s144, %s146
      %p153 = scmp.eq.s32.totalorder %s31, 1
      %p154 = por %p152, %p153
      %p155 = scmp.ne.s32.totalorder %s146, %s147
      %p156 = scmp.eq.s32.totalorder %s31, 0
      %p157 = por %p155, %p156
      %p158 = scmp.ne.s32.totalorder %s146, %s147
      %p159 = scmp.eq.s32.totalorder %s32, 1
      %p160 = por %p158, %p159
      %p162 = scmp.ne.s32.totalorder %s147, %s161
      %p163 = scmp.eq.s32.totalorder %s32, 0
      %p164 = por %p162, %p163
      %s166 = sadd.s32 %s165, 1
      %p169 = scmp.eq.s32.totalorder %s26, 1
      %p170 = scmp.ne.s32.totalorder %s165, %s167
      %p171 = scmp.eq.s32.totalorder %s26, 0
      %p172 = por %p170, %p171
      %p173 = scmp.ne.s32.totalorder %s165, %s167
      %p174 = scmp.eq.s32.totalorder %s31, 1
      %p175 = por %p173, %p174
      %p176 = scmp.ne.s32.totalorder %s167, %s168
      %p177 = scmp.eq.s32.totalorder %s31, 0
      %p178 = por %p176, %p177
      %p179 = scmp.ne.s32.totalorder %s167, %s168
      %p180 = scmp.eq.s32.totalorder %s32, 1
      %p181 = por %p179, %p180
      %p183 = scmp.ne.s32.totalorder %s168, %s182
      %p184 = scmp.eq.s32.totalorder %s32, 0
      %p185 = por %p183, %p184
      %s187 = sadd.s32 %s186, 1
      %p190 = scmp.eq.s32.totalorder %s26, 1
      %p191 = scmp.ne.s32.totalorder %s186, %s188
      %p192 = scmp.eq.s32.totalorder %s26, 0
      %p193 = por %p191, %p192
      %p194 = scmp.ne.s32.totalorder %s186, %s188
      %p195 = scmp.eq.s32.totalorder %s31, 1
      %p196 = por %p194, %p195
      %p197 = scmp.ne.s32.totalorder %s188, %s189
      %p198 = scmp.eq.s32.totalorder %s31, 0
      %p199 = por %p197, %p198
      %p200 = scmp.ne.s32.totalorder %s188, %s189
      %p201 = scmp.eq.s32.totalorder %s32, 1
      %p202 = por %p200, %p201
      %p204 = scmp.ne.s32.totalorder %s189, %s203
      %p205 = scmp.eq.s32.totalorder %s32, 0
      %p206 = por %p204, %p205
      %s208 = sadd.s32 %s207, 1
      %p211 = scmp.eq.s32.totalorder %s26, 1
      %p212 = scmp.ne.s32.totalorder %s207, %s209
      %p213 = scmp.eq.s32.totalorder %s26, 0
      %p214 = por %p212, %p213
      %p215 = scmp.ne.s32.totalorder %s207, %s209
      %p216 = scmp.eq.s32.totalorder %s31, 1
      %p217 = por %p215, %p216
      %p218 = scmp.ne.s32.totalorder %s209, %s210
      %p219 = scmp.eq.s32.totalorder %s31, 0
      %p220 = por %p218, %p219
      %p221 = scmp.ne.s32.totalorder %s209, %s210
      %p222 = scmp.eq.s32.totalorder %s32, 1
      %p223 = por %p221, %p222
      %p225 = scmp.ne.s32.totalorder %s210, %s224
      %p226 = scmp.eq.s32.totalorder %s32, 0
      %p227 = por %p225, %p226
      %s229 = sadd.s32 %s228, 1
      %p232 = scmp.eq.s32.totalorder %s26, 1
      %p233 = scmp.ne.s32.totalorder %s228, %s230
      %p234 = scmp.eq.s32.totalorder %s26, 0
      %p235 = por %p233, %p234
      %p236 = scmp.ne.s32.totalorder %s228, %s230
      %p237 = scmp.eq.s32.totalorder %s31, 1
      %p238 = por %p236, %p237
      %p239 = scmp.ne.s32.totalorder %s230, %s231
      %p240 = scmp.eq.s32.totalorder %s31, 0
      %p241 = por %p239, %p240
      %p242 = scmp.ne.s32.totalorder %s230, %s231
      %p243 = scmp.eq.s32.totalorder %s32, 1
      %p244 = por %p242, %p243
      %p246 = scmp.ne.s32.totalorder %s231, %s245
      %p247 = scmp.eq.s32.totalorder %s32, 0
      %p248 = por %p246, %p247
      %s250 = sadd.s32 %s249, 1
      %p253 = scmp.eq.s32.totalorder %s26, 1
      %p254 = scmp.ne.s32.totalorder %s249, %s251
      %p255 = scmp.eq.s32.totalorder %s26, 0
      %p256 = por %p254, %p255
      %p257 = scmp.ne.s32.totalorder %s249, %s251
      %p258 = scmp.eq.s32.totalorder %s31, 1
      %p259 = por %p257, %p258
      %p260 = scmp.ne.s32.totalorder %s251, %s252
      %p261 = scmp.eq.s32.totalorder %s31, 0
      %p262 = por %p260, %p261
      %p263 = scmp.ne.s32.totalorder %s251, %s252
      %p264 = scmp.eq.s32.totalorder %s32, 1
      %p265 = por %p263, %p264
      %p267 = scmp.ne.s32.totalorder %s252, %s266
      %p268 = scmp.eq.s32.totalorder %s32, 0
      %p269 = por %p267, %p268
      %s271 = sadd.s32 %s270, 1
      %p274 = scmp.eq.s32.totalorder %s26, 1
      %p275 = scmp.ne.s32.totalorder %s270, %s272
      %p276 = scmp.eq.s32.totalorder %s26, 0
      %p277 = por %p275, %p276
      %p278 = scmp.ne.s32.totalorder %s270, %s272
      %p279 = scmp.eq.s32.totalorder %s31, 1
      %p280 = por %p278, %p279
      %p281 = scmp.ne.s32.totalorder %s272, %s273
      %p282 = scmp.eq.s32.totalorder %s31, 0
      %p283 = por %p281, %p282
      %p284 = scmp.ne.s32.totalorder %s272, %s273
      %p285 = scmp.eq.s32.totalorder %s32, 1
      %p286 = por %p284, %p285
      %p288 = scmp.ne.s32.totalorder %s273, %s287
      %p289 = scmp.eq.s32.totalorder %s32, 0
      %p290 = por %p288, %p289
      %s291 = ssub.s32 %s26, %s33
      %p292 = scmp.eq.s32.totalorder %s291, 0
      %s294 = sadd.s32 %s293, 1
      %s295 = scalar_select %p292, %s293, %s294
      %p298 = pneg %p292
      %p299 = scmp.eq.s32.totalorder %s26, 1
      %p300 = por %p298, %p299
      %p301 = scmp.ne.s32.totalorder %s293, %s296
      %p302 = scmp.eq.s32.totalorder %s26, 0
      %p303 = por %p301, %p302
      %p304 = scmp.ne.s32.totalorder %s293, %s296
      %p305 = scmp.eq.s32.totalorder %s31, 1
      %p306 = por %p304, %p305
      %p307 = scmp.ne.s32.totalorder %s296, %s297
      %p308 = scmp.eq.s32.totalorder %s31, 0
      %p309 = por %p307, %p308
      %p310 = scmp.ne.s32.totalorder %s296, %s297
      %p311 = scmp.eq.s32.totalorder %s32, 1
      %p312 = por %p310, %p311
      %p314 = scmp.ne.s32.totalorder %s297, %s313
      %p315 = scmp.eq.s32.totalorder %s32, 0
      %p316 = por %p314, %p315
      %s317 = ssub.s32 %s26, %s33
      %p318 = scmp.eq.s32.totalorder %s317, 0
      %s320 = sadd.s32 %s319, 1
      %s321 = scalar_select %p318, %s319, %s320
      %p324 = pneg %p318
      %p325 = scmp.eq.s32.totalorder %s26, 1
      %p326 = por %p324, %p325
      %p327 = scmp.ne.s32.totalorder %s319, %s322
      %p328 = scmp.eq.s32.totalorder %s26, 0
      %p329 = por %p327, %p328
      %p330 = scmp.ne.s32.totalorder %s319, %s322
      %p331 = scmp.eq.s32.totalorder %s31, 1
      %p332 = por %p330, %p331
      %p333 = scmp.ne.s32.totalorder %s322, %s323
      %p334 = scmp.eq.s32.totalorder %s31, 0
      %p335 = por %p333, %p334
      %p336 = scmp.ne.s32.totalorder %s322, %s323
      %p337 = scmp.eq.s32.totalorder %s32, 1
      %p338 = por %p336, %p337
      %p340 = scmp.ne.s32.totalorder %s323, %s339
      %p341 = scmp.eq.s32.totalorder %s32, 0
      %p342 = por %p340, %p341
      %p343 = scmp.le.s32.totalorder 1, %s26
      %p344 = scmp.lt.s32.totalorder %s26, 3
      %p345 = pnand %p343, %p344
      %p346 = pneg %p345
      // Predicated region
      $region9: #{tpu_custom_call.1} parent=5 // pred_check
        _
      $region10: #{tpu_custom_call.1} parent=5 // pred_check_branch
        %348 = sbr.rel (%p345) target = $region12
      $region11: #{tpu_custom_call.1} parent=5 // pred_region
        %s349 = ssub.s32 %s26, 1
        // Predicated region
        $region13: #{tpu_custom_call.1} parent=11 // pred_check
          %p350 = pneg %p73
        $region14: #{tpu_custom_call.1} parent=11 // pred_check_branch
          %352 = sbr.rel (%p350) target = $region16
        $region15: #{tpu_custom_call.1} parent=11 // pred_region
          %s354 = ssub.s32 256, 256
          %355 = vsyncadd [#allocation3], %s354
          %s356 = sshll.u32 [#allocation2], 4
          %s357 = int_to_ptr.vmem [resolvable:$true] %s356
          %362 = dma.hbm_to_vmem [thread:$0]  %s1, 256, %s357, [#allocation3], 128, 128, 8
        $region16: #{tpu_custom_call.1} parent=11 // pred_fallthru
          _
        // Predicated region
        $region17: #{tpu_custom_call.1} parent=11 // pred_check
          %p363 = pneg %p94
        $region18: #{tpu_custom_call.1} parent=11 // pred_check_branch
          %365 = sbr.rel (%p363) target = $region20
        $region19: #{tpu_custom_call.1} parent=11 // pred_region
          _
        $region20: #{tpu_custom_call.1} parent=11 // pred_fallthru
          _
        // Predicated region
        $region21: #{tpu_custom_call.1} parent=11 // pred_check
          %p366 = pneg %p115
        $region22: #{tpu_custom_call.1} parent=11 // pred_check_branch
          %368 = sbr.rel (%p366) target = $region24
        $region23: #{tpu_custom_call.1} parent=11 // pred_region
          %s370 = ssub.s32 1024, 1024
          %371 = vsyncadd [#allocation6], %s370
          %s372 = sshll.u32 [#allocation5], 4
          %s373 = int_to_ptr.vmem [resolvable:$true] %s372
          %378 = dma.hbm_to_vmem [thread:$0]  %s3, 1024, %s373, [#allocation6], 64, 64, 4
        $region24: #{tpu_custom_call.1} parent=11 // pred_fallthru
          _
        // Predicated region
        $region25: #{tpu_custom_call.1} parent=11 // pred_check
          %p379 = pneg %p136
        $region26: #{tpu_custom_call.1} parent=11 // pred_check_branch
          %381 = sbr.rel (%p379) target = $region28
        $region27: #{tpu_custom_call.1} parent=11 // pred_region
          _
        $region28: #{tpu_custom_call.1} parent=11 // pred_fallthru
          _
        // Predicated region
        $region29: #{tpu_custom_call.1} parent=11 // pred_check
          %p382 = pneg %p157
        $region30: #{tpu_custom_call.1} parent=11 // pred_check_branch
          %384 = sbr.rel (%p382) target = $region32
        $region31: #{tpu_custom_call.1} parent=11 // pred_region
          %s386 = ssub.s32 1024, 1024
          %387 = vsyncadd [#allocation6], %s386
          %s388 = sshll.u32 [#allocation7], 4
          %s389 = int_to_ptr.vmem [resolvable:$true] %s388
          %394 = dma.hbm_to_vmem [thread:$0]  %s5, 1024, %s389, [#allocation6], 64, 64, 4
        $region32: #{tpu_custom_call.1} parent=11 // pred_fallthru
          _
        // Predicated region
        $region33: #{tpu_custom_call.1} parent=11 // pred_check
          %p395 = pneg %p178
        $region34: #{tpu_custom_call.1} parent=11 // pred_check_branch
          %397 = sbr.rel (%p395) target = $region36
        $region35: #{tpu_custom_call.1} parent=11 // pred_region
          _
        $region36: #{tpu_custom_call.1} parent=11 // pred_fallthru
          _
        // Predicated region
        $region37: #{tpu_custom_call.1} parent=11 // pred_check
          %p398 = pneg %p199
        $region38: #{tpu_custom_call.1} parent=11 // pred_check_branch
          %400 = sbr.rel (%p398) target = $region40
        $region39: #{tpu_custom_call.1} parent=11 // pred_region
          %s402 = ssub.s32 4096, 4096
          %403 = vsyncadd [#allocation9], %s402
          %s404 = sshll.u32 [#allocation8], 4
          %s405 = int_to_ptr.vmem [resolvable:$true] %s404
          %410 = dma.hbm_to_vmem [thread:$0]  %s7, 4096, %s405, [#allocation9], 256, 256, 16
        $region40: #{tpu_custom_call.1} parent=11 // pred_fallthru
          _
        // Predicated region
        $region41: #{tpu_custom_call.1} parent=11 // pred_check
          %p411 = pneg %p220
        $region42: #{tpu_custom_call.1} parent=11 // pred_check_branch
          %413 = sbr.rel (%p411) target = $region44
        $region43: #{tpu_custom_call.1} parent=11 // pred_region
          _
        $region44: #{tpu_custom_call.1} parent=11 // pred_fallthru
          _
        // Predicated region
        $region45: #{tpu_custom_call.1} parent=11 // pred_check
          %p414 = pneg %p241
        $region46: #{tpu_custom_call.1} parent=11 // pred_check_branch
          %416 = sbr.rel (%p414) target = $region48
        $region47: #{tpu_custom_call.1} parent=11 // pred_region
          %s418 = ssub.s32 1024, 1024
          %419 = vsyncadd [#allocation9], %s418
          %s420 = sshll.u32 [#allocation10], 4
          %s421 = int_to_ptr.vmem [resolvable:$true] %s420
          %426 = dma.hbm_to_vmem [thread:$0]  %s9, 1024, %s421, [#allocation9], 64, 64, 4
        $region48: #{tpu_custom_call.1} parent=11 // pred_fallthru
          _
        // Predicated region
        $region49: #{tpu_custom_call.1} parent=11 // pred_check
          %p427 = pneg %p262
        $region50: #{tpu_custom_call.1} parent=11 // pred_check_branch
          %429 = sbr.rel (%p427) target = $region52
        $region51: #{tpu_custom_call.1} parent=11 // pred_region
          _
        $region52: #{tpu_custom_call.1} parent=11 // pred_fallthru
          _
        // Predicated region
        $region53: #{tpu_custom_call.1} parent=11 // pred_check
          %p430 = pneg %p283
        $region54: #{tpu_custom_call.1} parent=11 // pred_check_branch
          %432 = sbr.rel (%p430) target = $region56
        $region55: #{tpu_custom_call.1} parent=11 // pred_region
          %s434 = ssub.s32 2048, 2048
          %435 = vsyncadd [#allocation12], %s434
          %s436 = sshll.u32 [#allocation11], 4
          %s437 = int_to_ptr.vmem [resolvable:$true] %s436
          %442 = dma.hbm_to_vmem [thread:$0]  %s11, 2048, %s437, [#allocation12], 128, 128, 8
        $region56: #{tpu_custom_call.1} parent=11 // pred_fallthru
          _
      $region12: #{tpu_custom_call.1} parent=5 // pred_fallthru
        _
      %p443 = scmp.lt.s32.totalorder %s26, 2
      // Predicated region
      $region57: #{tpu_custom_call.1} parent=5 // pred_check
        %p444 = pneg %p443
      $region58: #{tpu_custom_call.1} parent=5 // pred_check_branch
        %446 = sbr.rel (%p444) target = $region60
      $region59: #{tpu_custom_call.1} parent=5 // pred_region
        // Predicated region
        $region61: #{tpu_custom_call.1} parent=59 // pred_check
          %p447 = pneg %p46
        $region62: #{tpu_custom_call.1} parent=59 // pred_check_branch
          %449 = sbr.rel (%p447) target = $region64
        $region63: #{tpu_custom_call.1} parent=59 // pred_region
          %s450 = smul.u32 2, %s26
          %p451 = scmp.lt.s32.totalorder %s450, 3
          %s452 = scalar_select %p451, %s450, 3
          %s453 = smul.addr %s452, 4
          %s454 = scalar_lea.vmem %s0, %s453
          %s455 = smul.u32 2, %s26
        $region64: #{tpu_custom_call.1} parent=59 // pred_fallthru
          _
        // Predicated region
        $region65: #{tpu_custom_call.1} parent=59 // pred_check
          %p456 = pneg %p303
        $region66: #{tpu_custom_call.1} parent=59 // pred_check_branch
          %458 = sbr.rel (%p456) target = $region68
        $region67: #{tpu_custom_call.1} parent=59 // pred_region
          %s459 = smul.u32 2, %s26
          %p460 = scmp.lt.s32.totalorder %s459, 3
          %s461 = scalar_select %p460, %s459, 3
          %s462 = smul.addr %s461, 8
          %s463 = scalar_lea.vmem %s12, %s462
          %s464 = smul.u32 2, %s26
        $region68: #{tpu_custom_call.1} parent=59 // pred_fallthru
          _
      $region60: #{tpu_custom_call.1} parent=5 // pred_fallthru
        _
      %p465 = scmp.le.s32.totalorder 1, %s26
      %p466 = scmp.lt.s32.totalorder %s26, 3
      %p467 = pnand %p465, %p466
      %p468 = pneg %p467
      // Predicated region
      $region69: #{tpu_custom_call.1} parent=5 // pred_check
        _
      $region70: #{tpu_custom_call.1} parent=5 // pred_check_branch
        %470 = sbr.rel (%p467) target = $region72
      $region71: #{tpu_custom_call.1} parent=5 // pred_region
        %s471 = ssub.s32 %s26, 1
        // Predicated region
        $region73: #{tpu_custom_call.1} parent=71 // pred_check
          %p472 = pneg %p73
        $region74: #{tpu_custom_call.1} parent=71 // pred_check_branch
          %474 = sbr.rel (%p472) target = $region76
        $region75: #{tpu_custom_call.1} parent=71 // pred_region
          %475 = dma.done [#allocation3], 256
        $region76: #{tpu_custom_call.1} parent=71 // pred_fallthru
          _
        // Predicated region
        $region77: #{tpu_custom_call.1} parent=71 // pred_check
          %p476 = pneg %p115
        $region78: #{tpu_custom_call.1} parent=71 // pred_check_branch
          %478 = sbr.rel (%p476) target = $region80
        $region79: #{tpu_custom_call.1} parent=71 // pred_region
          %479 = dma.done [#allocation6], 1024
        $region80: #{tpu_custom_call.1} parent=71 // pred_fallthru
          _
        // Predicated region
        $region81: #{tpu_custom_call.1} parent=71 // pred_check
          %p480 = pneg %p157
        $region82: #{tpu_custom_call.1} parent=71 // pred_check_branch
          %482 = sbr.rel (%p480) target = $region84
        $region83: #{tpu_custom_call.1} parent=71 // pred_region
          %483 = dma.done [#allocation6], 1024
        $region84: #{tpu_custom_call.1} parent=71 // pred_fallthru
          _
        // Predicated region
        $region85: #{tpu_custom_call.1} parent=71 // pred_check
          %p484 = pneg %p199
        $region86: #{tpu_custom_call.1} parent=71 // pred_check_branch
          %486 = sbr.rel (%p484) target = $region88
        $region87: #{tpu_custom_call.1} parent=71 // pred_region
          %487 = dma.done [#allocation9], 4096
        $region88: #{tpu_custom_call.1} parent=71 // pred_fallthru
          _
        // Predicated region
        $region89: #{tpu_custom_call.1} parent=71 // pred_check
          %p488 = pneg %p241
        $region90: #{tpu_custom_call.1} parent=71 // pred_check_branch
          %490 = sbr.rel (%p488) target = $region92
        $region91: #{tpu_custom_call.1} parent=71 // pred_region
          %491 = dma.done [#allocation9], 1024
        $region92: #{tpu_custom_call.1} parent=71 // pred_fallthru
          _
        // Predicated region
        $region93: #{tpu_custom_call.1} parent=71 // pred_check
          %p492 = pneg %p283
        $region94: #{tpu_custom_call.1} parent=71 // pred_check_branch
          %494 = sbr.rel (%p492) target = $region96
        $region95: #{tpu_custom_call.1} parent=71 // pred_region
          %495 = dma.done [#allocation12], 2048
        $region96: #{tpu_custom_call.1} parent=71 // pred_fallthru
          _
        %s496 = smul.u32 2, %s31
        %p497 = scmp.lt.s32.totalorder %s496, 3
        %s498 = scalar_select %p497, %s496, 3
        %s499 = smul.addr %s498, 4
        %s500 = scalar_lea.vmem %s0, %s499
        %p501 = pneg %p52
        %p502 = pneg %p49
        %p503 = pneg %p73
        %p504 = pneg %p70
        %p505 = pneg %p94
        %p506 = pneg %p91
        %p507 = pneg %p115
        %p508 = pneg %p112
        %p509 = pneg %p136
        %p510 = pneg %p133
        %p511 = pneg %p157
        %p512 = pneg %p154
        %p513 = pneg %p178
        %p514 = pneg %p175
        %p515 = pneg %p199
        %p516 = pneg %p196
        %p517 = pneg %p220
        %p518 = pneg %p217
        %p519 = pneg %p241
        %p520 = pneg %p238
        %p521 = pneg %p262
        %p522 = pneg %p259
        %p523 = pneg %p283
        %p524 = pneg %p280
        %s525 = smul.u32 2, %s31
        %p526 = scmp.lt.s32.totalorder %s525, 3
        %s527 = scalar_select %p526, %s525, 3
        %s528 = smul.addr %s527, 8
        %s529 = scalar_lea.vmem %s12, %s528
        %p530 = pneg %p309
        %p531 = pneg %p306
        %p532 = pneg %p335
        %p533 = pneg %p332
        %s534 = sand.u32 %s322, 1
        %s535 = scalar_lea.sflag [#allocation4], %s534
        %s536 = sand.u32 %s322, 1
        %s537 = smul.addr %s536, 16
        %s538 = scalar_lea.vmem [#allocation13], %s537
        %s539 = smul.u32 2, %s31
        %p540 = scmp.lt.s32.totalorder %s539, 3
        %s541 = scalar_select %p540, %s539, 3
        %s542 = smul.addr %s541, 4
        %s543 = scalar_lea.vmem %s0, %s542
        %s544 = smul.u32 2, %s31
        %s545 = smul.u32 2, %s31
        %p546 = scmp.lt.s32.totalorder %s545, 3
        %s547 = scalar_select %p546, %s545, 3
        %s548 = smul.addr %s547, 8
        %s549 = scalar_lea.vmem %s12, %s548
        %s550 = smul.u32 2, %s31
        %s551 = smul.u32 2, %s31
        %v553 = vld [vmem:[%s543] sm:$0xf]
        %v554 = vld [vmem:[%s543 + $0x4] sm:$0xf]
        %v555 = vld [vmem:[#allocation2] sm:$0xff]
        %v556 = vld [vmem:[#allocation2 + $0x8] sm:$0xff]
        %v557 = vld [vmem:[%s2] sm:$0x3]
        %v559 = vlaneseq
        %v560 = vshrl.u32 %v559, 7
        %v561 = vsub.s32 0, %v560
        %v562 = vrot.slane %v557, %v561
        %v563 = vlaneseq
        %v564 = vshrl.u32 %v563, 7
        %v565 = vsub.s32 1, %v564
        %v566 = vrot.slane %v557, %v565
        %v571 = vunpack.c.l.b16 %v553
        %v572 = vunpack.c.l.b16 %v554
        %v573 = vpack.c.b16 %v572, %v571
        %v576 = vunpack.c.l.b16 %v555
        %v577 = vunpack.c.h.b16 %v555
        %v578 = vunpack.c.l.b16 %v556
        %v579 = vunpack.c.h.b16 %v556
        %v580 = vpack.c.b16 %v578, %v576
        %v581 = vpack.c.b16 %v579, %v577
        %vm584 = vcmask 130048
        %v586 = vsel %vm584, %v573, 0
        %588 = vmatprep.subr.bf16.mxu0 0
        %589 = vmatpush1.bf16.msra.mxu0 0
        %590 = vmatprep.subr.bf16.mxu0 0
        %591 = vmatpush1.bf16.msra.mxu0 0
        %592 = vmatprep.subr.bf16.mxu0 0
        %593 = vmatpush1.bf16.msra.mxu0 0
        %594 = vmatprep.subr.bf16.mxu0 0
        %595 = vmatpush1.bf16.msra.mxu0 0
        %596 = vmatprep.subr.bf16.mxu0 0
        %597 = vmatpush1.bf16.msra.mxu0 0
        %598 = vmatprep.subr.bf16.mxu0 0
        %599 = vmatpush1.bf16.msra.mxu0 0
        %600 = vmatprep.subr.bf16.mxu0 0
        %601 = vmatpush1.bf16.msra.mxu0 0
        %602 = vmatprep.subr.bf16.mxu0 %v581
        %603 = vmatpush1.bf16.msra.mxu0 %v580
        %604 = vmatprep.subr.bf16.mxu0 0
        %605 = vmatpush2.bf16.msra.mxu0 0
        %606 = vmatprep.subr.bf16.mxu0 0
        %607 = vmatpush2.bf16.msra.mxu0 0
        %608 = vmatprep.subr.bf16.mxu0 0
        %609 = vmatpush2.bf16.msra.mxu0 0
        %610 = vmatprep.subr.bf16.mxu0 0
        %611 = vmatpush2.bf16.msra.mxu0 0
        %612 = vmatprep.subr.bf16.mxu0 0
        %613 = vmatpush2.bf16.msra.mxu0 0
        %614 = vmatprep.subr.bf16.mxu0 0
        %615 = vmatpush2.bf16.msra.mxu0 0
        %616 = vmatprep.subr.bf16.mxu0 0
        %617 = vmatpush2.bf16.msra.mxu0 0
        %618 = vmatprep.subr.bf16.mxu0 0
        %619 = vmatpush2.bf16.msra.mxu0 0
        %620 = vmatprep.mubr.bf16.mxu0 0
        %621 = vmatmul.mubr.bf16.gmra.mxu0 %v586
        %v622 = vpop.f32.mrf.mxu0
        %v623 = vadd.f32 %v562, %v622
        %v624 = vpop.f32.mrf.mxu0
        %v625 = vadd.f32 %v566, %v624
        %v626 = vpop.f32.mrf.mxu0
        %v627 = vadd.f32 %v562, %v626
        %v628 = vpop.f32.mrf.mxu0
        %v629 = vadd.f32 %v566, %v628
        %630 = vdwg.mxu0
        %v631 = vmax.f32 %v623, 0.0
        %v632 = vmax.f32 %v625, 0.0
        %v633 = vmax.f32 %v627, 0.0
        %v634 = vmax.f32 %v629, 0.0
        %v635 = vpack.c.bf16 %v633, %v631
        %v636 = vpack.c.bf16 %v634, %v632
        %v637 = vld [vmem:[#allocation5] sm:$0xf]
        %v638 = vld [vmem:[#allocation5 + $0x4] sm:$0xf]
        %v639 = vld [vmem:[#allocation5 + $0x8] sm:$0xf]
        %v640 = vld [vmem:[#allocation5 + $0xc] sm:$0xf]
        %v641 = vld [vmem:[#allocation5 + $0x10] sm:$0xf]
        %v642 = vld [vmem:[#allocation5 + $0x14] sm:$0xf]
        %v643 = vld [vmem:[#allocation5 + $0x18] sm:$0xf]
        %v644 = vld [vmem:[#allocation5 + $0x1c] sm:$0xf]
        %v645 = vld [vmem:[#allocation5 + $0x20] sm:$0xf]
        %v646 = vld [vmem:[#allocation5 + $0x24] sm:$0xf]
        %v647 = vld [vmem:[#allocation5 + $0x28] sm:$0xf]
        %v648 = vld [vmem:[#allocation5 + $0x2c] sm:$0xf]
        %v649 = vld [vmem:[#allocation5 + $0x30] sm:$0xf]
        %v650 = vld [vmem:[#allocation5 + $0x34] sm:$0xf]
        %v651 = vld [vmem:[#allocation5 + $0x38] sm:$0xf]
        %v652 = vld [vmem:[#allocation5 + $0x3c] sm:$0xf]
        %v653 = vld [vmem:[%s4] sm:$0x1]
        %v655 = vlaneseq
        %v656 = vshrl.u32 %v655, 7
        %v657 = vsub.s32 0, %v656
        %v658 = vrot.slane %v653, %v657
        %v676 = vunpack.c.l.b16 %v637
        %v677 = vunpack.c.l.b16 %v638
        %v678 = vunpack.c.l.b16 %v639
        %v679 = vunpack.c.l.b16 %v640
        %v680 = vunpack.c.l.b16 %v641
        %v681 = vunpack.c.l.b16 %v642
        %v682 = vunpack.c.l.b16 %v643
        %v683 = vunpack.c.l.b16 %v644
        %v684 = vunpack.c.l.b16 %v645
        %v685 = vunpack.c.l.b16 %v646
        %v686 = vunpack.c.l.b16 %v647
        %v687 = vunpack.c.l.b16 %v648
        %v688 = vunpack.c.l.b16 %v649
        %v689 = vunpack.c.l.b16 %v650
        %v690 = vunpack.c.l.b16 %v651
        %v691 = vunpack.c.l.b16 %v652
        %v692 = vpack.c.b16 %v677, %v676
        %v693 = vpack.c.b16 %v679, %v678
        %v694 = vpack.c.b16 %v681, %v680
        %v695 = vpack.c.b16 %v683, %v682
        %v696 = vpack.c.b16 %v685, %v684
        %v697 = vpack.c.b16 %v687, %v686
        %v698 = vpack.c.b16 %v689, %v688
        %v699 = vpack.c.b16 %v691, %v690
        %708 = vmatprep.subr.bf16.mxu0 0
        %709 = vmatpush1.bf16.msra.mxu0 %v699
        %710 = vmatprep.subr.bf16.mxu0 0
        %711 = vmatpush1.bf16.msra.mxu0 %v698
        %712 = vmatprep.subr.bf16.mxu0 0
        %713 = vmatpush1.bf16.msra.mxu0 %v697
        %714 = vmatprep.subr.bf16.mxu0 0
        %715 = vmatpush1.bf16.msra.mxu0 %v696
        %716 = vmatprep.subr.bf16.mxu0 0
        %717 = vmatpush1.bf16.msra.mxu0 %v695
        %718 = vmatprep.subr.bf16.mxu0 0
        %719 = vmatpush1.bf16.msra.mxu0 %v694
        %720 = vmatprep.subr.bf16.mxu0 0
        %721 = vmatpush1.bf16.msra.mxu0 %v693
        %722 = vmatprep.subr.bf16.mxu0 0
        %723 = vmatpush1.bf16.msra.mxu0 %v692
        %724 = vmatprep.subr.bf16.mxu0 0
        %725 = vmatpush2.bf16.msra.mxu0 0
        %726 = vmatprep.subr.bf16.mxu0 0
        %727 = vmatpush2.bf16.msra.mxu0 0
        %728 = vmatprep.subr.bf16.mxu0 0
        %729 = vmatpush2.bf16.msra.mxu0 0
        %730 = vmatprep.subr.bf16.mxu0 0
        %731 = vmatpush2.bf16.msra.mxu0 0
        %732 = vmatprep.subr.bf16.mxu0 0
        %733 = vmatpush2.bf16.msra.mxu0 0
        %734 = vmatprep.subr.bf16.mxu0 0
        %735 = vmatpush2.bf16.msra.mxu0 0
        %736 = vmatprep.subr.bf16.mxu0 0
        %737 = vmatpush2.bf16.msra.mxu0 0
        %738 = vmatprep.subr.bf16.mxu0 0
        %739 = vmatpush2.bf16.msra.mxu0 0
        %740 = vmatprep.mubr.bf16.mxu0 0
        %741 = vmatmul.mubr.bf16.gmra.mxu0 %v635
        %v742 = vpop.f32.mrf.mxu0
        %v743 = vadd.f32 %v658, %v742
        %v744 = vpop.f32.mrf.mxu0
        %v745 = vpop.f32.mrf.mxu0
        %v746 = vadd.f32 %v658, %v745
        %v747 = vpop.f32.mrf.mxu0
        %748 = vdwg.mxu0
        %v749 = vmax.f32 %v743, 0.0
        %v750 = vmax.f32 %v746, 0.0
        %v751 = vpack.c.bf16 %v750, %v749
        %v752 = vld [vmem:[#allocation7] sm:$0xf]
        %v753 = vld [vmem:[#allocation7 + $0x4] sm:$0xf]
        %v754 = vld [vmem:[#allocation7 + $0x8] sm:$0xf]
        %v755 = vld [vmem:[#allocation7 + $0xc] sm:$0xf]
        %v756 = vld [vmem:[#allocation7 + $0x10] sm:$0xf]
        %v757 = vld [vmem:[#allocation7 + $0x14] sm:$0xf]
        %v758 = vld [vmem:[#allocation7 + $0x18] sm:$0xf]
        %v759 = vld [vmem:[#allocation7 + $0x1c] sm:$0xf]
        %v760 = vld [vmem:[#allocation7 + $0x20] sm:$0xf]
        %v761 = vld [vmem:[#allocation7 + $0x24] sm:$0xf]
        %v762 = vld [vmem:[#allocation7 + $0x28] sm:$0xf]
        %v763 = vld [vmem:[#allocation7 + $0x2c] sm:$0xf]
        %v764 = vld [vmem:[#allocation7 + $0x30] sm:$0xf]
        %v765 = vld [vmem:[#allocation7 + $0x34] sm:$0xf]
        %v766 = vld [vmem:[#allocation7 + $0x38] sm:$0xf]
        %v767 = vld [vmem:[#allocation7 + $0x3c] sm:$0xf]
        %v768 = vld [vmem:[%s6] sm:$0x1]
        %v770 = vlaneseq
        %v771 = vshrl.u32 %v770, 7
        %v772 = vsub.s32 0, %v771
        %v773 = vrot.slane %v768, %v772
        %v791 = vunpack.c.l.b16 %v752
        %v792 = vunpack.c.l.b16 %v753
        %v793 = vunpack.c.l.b16 %v754
        %v794 = vunpack.c.l.b16 %v755
        %v795 = vunpack.c.l.b16 %v756
        %v796 = vunpack.c.l.b16 %v757
        %v797 = vunpack.c.l.b16 %v758
        %v798 = vunpack.c.l.b16 %v759
        %v799 = vunpack.c.l.b16 %v760
        %v800 = vunpack.c.l.b16 %v761
        %v801 = vunpack.c.l.b16 %v762
        %v802 = vunpack.c.l.b16 %v763
        %v803 = vunpack.c.l.b16 %v764
        %v804 = vunpack.c.l.b16 %v765
        %v805 = vunpack.c.l.b16 %v766
        %v806 = vunpack.c.l.b16 %v767
        %v807 = vpack.c.b16 %v792, %v791
        %v808 = vpack.c.b16 %v794, %v793
        %v809 = vpack.c.b16 %v796, %v795
        %v810 = vpack.c.b16 %v798, %v797
        %v811 = vpack.c.b16 %v800, %v799
        %v812 = vpack.c.b16 %v802, %v801
        %v813 = vpack.c.b16 %v804, %v803
        %v814 = vpack.c.b16 %v806, %v805
        %823 = vmatprep.subr.bf16.mxu0 0
        %824 = vmatpush1.bf16.msra.mxu0 %v814
        %825 = vmatprep.subr.bf16.mxu0 0
        %826 = vmatpush1.bf16.msra.mxu0 %v813
        %827 = vmatprep.subr.bf16.mxu0 0
        %828 = vmatpush1.bf16.msra.mxu0 %v812
        %829 = vmatprep.subr.bf16.mxu0 0
        %830 = vmatpush1.bf16.msra.mxu0 %v811
        %831 = vmatprep.subr.bf16.mxu0 0
        %832 = vmatpush1.bf16.msra.mxu0 %v810
        %833 = vmatprep.subr.bf16.mxu0 0
        %834 = vmatpush1.bf16.msra.mxu0 %v809
        %835 = vmatprep.subr.bf16.mxu0 0
        %836 = vmatpush1.bf16.msra.mxu0 %v808
        %837 = vmatprep.subr.bf16.mxu0 0
        %838 = vmatpush1.bf16.msra.mxu0 %v807
        %839 = vmatprep.subr.bf16.mxu0 0
        %840 = vmatpush2.bf16.msra.mxu0 0
        %841 = vmatprep.subr.bf16.mxu0 0
        %842 = vmatpush2.bf16.msra.mxu0 0
        %843 = vmatprep.subr.bf16.mxu0 0
        %844 = vmatpush2.bf16.msra.mxu0 0
        %845 = vmatprep.subr.bf16.mxu0 0
        %846 = vmatpush2.bf16.msra.mxu0 0
        %847 = vmatprep.subr.bf16.mxu0 0
        %848 = vmatpush2.bf16.msra.mxu0 0
        %849 = vmatprep.subr.bf16.mxu0 0
        %850 = vmatpush2.bf16.msra.mxu0 0
        %851 = vmatprep.subr.bf16.mxu0 0
        %852 = vmatpush2.bf16.msra.mxu0 0
        %853 = vmatprep.subr.bf16.mxu0 0
        %854 = vmatpush2.bf16.msra.mxu0 0
        %855 = vmatprep.mubr.bf16.mxu0 0
        %856 = vmatmul.mubr.bf16.gmra.mxu0 %v636
        %v857 = vpop.f32.mrf.mxu0
        %v858 = vadd.f32 %v773, %v857
        %v859 = vpop.f32.mrf.mxu0
        %v860 = vpop.f32.mrf.mxu0
        %v861 = vadd.f32 %v773, %v860
        %v862 = vpop.f32.mrf.mxu0
        %863 = vdwg.mxu0
        %v864 = vmax.f32 %v858, 0.0
        %v865 = vmax.f32 %v861, 0.0
        %v866 = vpack.c.bf16 %v865, %v864
        %v867 = vld [vmem:[#allocation8] sm:$0xff]
        %v868 = vld [vmem:[#allocation8 + $0x8] sm:$0xff]
        %v869 = vld [vmem:[#allocation8 + $0x10] sm:$0xff]
        %v870 = vld [vmem:[#allocation8 + $0x18] sm:$0xff]
        %v871 = vld [vmem:[#allocation8 + $0x20] sm:$0xff]
        %v872 = vld [vmem:[#allocation8 + $0x28] sm:$0xff]
        %v873 = vld [vmem:[#allocation8 + $0x30] sm:$0xff]
        %v874 = vld [vmem:[#allocation8 + $0x38] sm:$0xff]
        %v875 = vld [vmem:[#allocation8 + $0x40] sm:$0xff]
        %v876 = vld [vmem:[#allocation8 + $0x48] sm:$0xff]
        %v877 = vld [vmem:[#allocation8 + $0x50] sm:$0xff]
        %v878 = vld [vmem:[#allocation8 + $0x58] sm:$0xff]
        %v879 = vld [vmem:[#allocation8 + $0x60] sm:$0xff]
        %v880 = vld [vmem:[#allocation8 + $0x68] sm:$0xff]
        %v881 = vld [vmem:[#allocation8 + $0x70] sm:$0xff]
        %v882 = vld [vmem:[#allocation8 + $0x78] sm:$0xff]
        %v883 = vld [vmem:[#allocation8 + $0x80] sm:$0xff]
        %v884 = vld [vmem:[#allocation8 + $0x88] sm:$0xff]
        %v885 = vld [vmem:[#allocation8 + $0x90] sm:$0xff]
        %v886 = vld [vmem:[#allocation8 + $0x98] sm:$0xff]
        %v887 = vld [vmem:[#allocation8 + $0xa0] sm:$0xff]
        %v888 = vld [vmem:[#allocation8 + $0xa8] sm:$0xff]
        %v889 = vld [vmem:[#allocation8 + $0xb0] sm:$0xff]
        %v890 = vld [vmem:[#allocation8 + $0xb8] sm:$0xff]
        %v891 = vld [vmem:[#allocation8 + $0xc0] sm:$0xff]
        %v892 = vld [vmem:[#allocation8 + $0xc8] sm:$0xff]
        %v893 = vld [vmem:[#allocation8 + $0xd0] sm:$0xff]
        %v894 = vld [vmem:[#allocation8 + $0xd8] sm:$0xff]
        %v895 = vld [vmem:[#allocation8 + $0xe0] sm:$0xff]
        %v896 = vld [vmem:[#allocation8 + $0xe8] sm:$0xff]
        %v897 = vld [vmem:[#allocation8 + $0xf0] sm:$0xff]
        %v898 = vld [vmem:[#allocation8 + $0xf8] sm:$0xff]
        %v899 = vld [vmem:[%s8] sm:$0xf]
        %v901 = vlaneseq
        %v902 = vshrl.u32 %v901, 7
        %v903 = vsub.s32 0, %v902
        %v904 = vrot.slane %v899, %v903
        %v905 = vlaneseq
        %v906 = vshrl.u32 %v905, 7
        %v907 = vsub.s32 1, %v906
        %v908 = vrot.slane %v899, %v907
        %v909 = vlaneseq
        %v910 = vshrl.u32 %v909, 7
        %v911 = vsub.s32 2, %v910
        %v912 = vrot.slane %v899, %v911
        %v913 = vlaneseq
        %v914 = vshrl.u32 %v913, 7
        %v915 = vsub.s32 3, %v914
        %v916 = vrot.slane %v899, %v915
        %v953 = vunpack.c.l.b16 %v867
        %v954 = vunpack.c.h.b16 %v867
        %v955 = vunpack.c.l.b16 %v868
        %v956 = vunpack.c.h.b16 %v868
        %v957 = vunpack.c.l.b16 %v869
        %v958 = vunpack.c.h.b16 %v869
        %v959 = vunpack.c.l.b16 %v870
        %v960 = vunpack.c.h.b16 %v870
        %v961 = vunpack.c.l.b16 %v871
        %v962 = vunpack.c.h.b16 %v871
        %v963 = vunpack.c.l.b16 %v872
        %v964 = vunpack.c.h.b16 %v872
        %v965 = vunpack.c.l.b16 %v873
        %v966 = vunpack.c.h.b16 %v873
        %v967 = vunpack.c.l.b16 %v874
        %v968 = vunpack.c.h.b16 %v874
        %v969 = vunpack.c.l.b16 %v875
        %v970 = vunpack.c.h.b16 %v875
        %v971 = vunpack.c.l.b16 %v876
        %v972 = vunpack.c.h.b16 %v876
        %v973 = vunpack.c.l.b16 %v877
        %v974 = vunpack.c.h.b16 %v877
        %v975 = vunpack.c.l.b16 %v878
        %v976 = vunpack.c.h.b16 %v878
        %v977 = vunpack.c.l.b16 %v879
        %v978 = vunpack.c.h.b16 %v879
        %v979 = vunpack.c.l.b16 %v880
        %v980 = vunpack.c.h.b16 %v880
        %v981 = vunpack.c.l.b16 %v881
        %v982 = vunpack.c.h.b16 %v881
        %v983 = vunpack.c.l.b16 %v882
        %v984 = vunpack.c.h.b16 %v882
        %v985 = vunpack.c.l.b16 %v883
        %v986 = vunpack.c.h.b16 %v883
        %v987 = vunpack.c.l.b16 %v884
        %v988 = vunpack.c.h.b16 %v884
        %v989 = vunpack.c.l.b16 %v885
        %v990 = vunpack.c.h.b16 %v885
        %v991 = vunpack.c.l.b16 %v886
        %v992 = vunpack.c.h.b16 %v886
        %v993 = vunpack.c.l.b16 %v887
        %v994 = vunpack.c.h.b16 %v887
        %v995 = vunpack.c.l.b16 %v888
        %v996 = vunpack.c.h.b16 %v888
        %v997 = vunpack.c.l.b16 %v889
        %v998 = vunpack.c.h.b16 %v889
        %v999 = vunpack.c.l.b16 %v890
        %v1000 = vunpack.c.h.b16 %v890
        %v1001 = vunpack.c.l.b16 %v891
        %v1002 = vunpack.c.h.b16 %v891
        %v1003 = vunpack.c.l.b16 %v892
        %v1004 = vunpack.c.h.b16 %v892
        %v1005 = vunpack.c.l.b16 %v893
        %v1006 = vunpack.c.h.b16 %v893
        %v1007 = vunpack.c.l.b16 %v894
        %v1008 = vunpack.c.h.b16 %v894
        %v1009 = vunpack.c.l.b16 %v895
        %v1010 = vunpack.c.h.b16 %v895
        %v1011 = vunpack.c.l.b16 %v896
        %v1012 = vunpack.c.h.b16 %v896
        %v1013 = vunpack.c.l.b16 %v897
        %v1014 = vunpack.c.h.b16 %v897
        %v1015 = vunpack.c.l.b16 %v898
        %v1016 = vunpack.c.h.b16 %v898
        %v1017 = vpack.c.b16 %v957, %v953
        %v1018 = vpack.c.b16 %v958, %v954
        %v1019 = vpack.c.b16 %v959, %v955
        %v1020 = vpack.c.b16 %v960, %v956
        %v1021 = vpack.c.b16 %v965, %v961
        %v1022 = vpack.c.b16 %v966, %v962
        %v1023 = vpack.c.b16 %v967, %v963
        %v1024 = vpack.c.b16 %v968, %v964
        %v1025 = vpack.c.b16 %v973, %v969
        %v1026 = vpack.c.b16 %v974, %v970
        %v1027 = vpack.c.b16 %v975, %v971
        %v1028 = vpack.c.b16 %v976, %v972
        %v1029 = vpack.c.b16 %v981, %v977
        %v1030 = vpack.c.b16 %v982, %v978
        %v1031 = vpack.c.b16 %v983, %v979
        %v1032 = vpack.c.b16 %v984, %v980
        %v1033 = vpack.c.b16 %v989, %v985
        %v1034 = vpack.c.b16 %v990, %v986
        %v1035 = vpack.c.b16 %v991, %v987
        %v1036 = vpack.c.b16 %v992, %v988
        %v1037 = vpack.c.b16 %v997, %v993
        %v1038 = vpack.c.b16 %v998, %v994
        %v1039 = vpack.c.b16 %v999, %v995
        %v1040 = vpack.c.b16 %v1000, %v996
        %v1041 = vpack.c.b16 %v1005, %v1001
        %v1042 = vpack.c.b16 %v1006, %v1002
        %v1043 = vpack.c.b16 %v1007, %v1003
        %v1044 = vpack.c.b16 %v1008, %v1004
        %v1045 = vpack.c.b16 %v1013, %v1009
        %v1046 = vpack.c.b16 %v1014, %v1010
        %v1047 = vpack.c.b16 %v1015, %v1011
        %v1048 = vpack.c.b16 %v1016, %v1012
        %1081 = vmatprep.subr.bf16.mxu0 %v1046
        %1082 = vmatpush1.bf16.msra.mxu0 %v1045
        %1083 = vmatprep.subr.bf16.mxu0 %v1042
        %1084 = vmatpush1.bf16.msra.mxu0 %v1041
        %1085 = vmatprep.subr.bf16.mxu0 %v1038
        %1086 = vmatpush1.bf16.msra.mxu0 %v1037
        %1087 = vmatprep.subr.bf16.mxu0 %v1034
        %1088 = vmatpush1.bf16.msra.mxu0 %v1033
        %1089 = vmatprep.subr.bf16.mxu0 %v1030
        %1090 = vmatpush1.bf16.msra.mxu0 %v1029
        %1091 = vmatprep.subr.bf16.mxu0 %v1026
        %1092 = vmatpush1.bf16.msra.mxu0 %v1025
        %1093 = vmatprep.subr.bf16.mxu0 %v1022
        %1094 = vmatpush1.bf16.msra.mxu0 %v1021
        %1095 = vmatprep.subr.bf16.mxu0 %v1018
        %1096 = vmatpush1.bf16.msra.mxu0 %v1017
        %1097 = vmatprep.subr.bf16.mxu0 0
        %1098 = vmatpush2.bf16.msra.mxu0 0
        %1099 = vmatprep.subr.bf16.mxu0 0
        %1100 = vmatpush2.bf16.msra.mxu0 0
        %1101 = vmatprep.subr.bf16.mxu0 0
        %1102 = vmatpush2.bf16.msra.mxu0 0
        %1103 = vmatprep.subr.bf16.mxu0 0
        %1104 = vmatpush2.bf16.msra.mxu0 0
        %1105 = vmatprep.subr.bf16.mxu0 0
        %1106 = vmatpush2.bf16.msra.mxu0 0
        %1107 = vmatprep.subr.bf16.mxu0 0
        %1108 = vmatpush2.bf16.msra.mxu0 0
        %1109 = vmatprep.subr.bf16.mxu0 0
        %1110 = vmatpush2.bf16.msra.mxu0 0
        %1111 = vmatprep.subr.bf16.mxu0 0
        %1112 = vmatpush2.bf16.msra.mxu0 0
        %1113 = vmatprep.mubr.bf16.mxu0 0
        %1114 = vmatmul.mubr.bf16.gmra.mxu0 %v751
        %v1115 = vpop.f32.mrf.mxu0
        %v1116 = vadd.f32 %v904, %v1115
        %v1117 = vpop.f32.mrf.mxu0
        %v1118 = vadd.f32 %v908, %v1117
        %v1119 = vpop.f32.mrf.mxu0
        %v1120 = vadd.f32 %v904, %v1119
        %v1121 = vpop.f32.mrf.mxu0
        %v1122 = vadd.f32 %v908, %v1121
        %1123 = vdwg.mxu0
        %1124 = vmatprep.subr.bf16.mxu0 %v1048
        %1125 = vmatpush1.bf16.msra.mxu0 %v1047
        %1126 = vmatprep.subr.bf16.mxu0 %v1044
        %1127 = vmatpush1.bf16.msra.mxu0 %v1043
        %1128 = vmatprep.subr.bf16.mxu0 %v1040
        %1129 = vmatpush1.bf16.msra.mxu0 %v1039
        %1130 = vmatprep.subr.bf16.mxu0 %v1036
        %1131 = vmatpush1.bf16.msra.mxu0 %v1035
        %1132 = vmatprep.subr.bf16.mxu0 %v1032
        %1133 = vmatpush1.bf16.msra.mxu0 %v1031
        %1134 = vmatprep.subr.bf16.mxu0 %v1028
        %1135 = vmatpush1.bf16.msra.mxu0 %v1027
        %1136 = vmatprep.subr.bf16.mxu0 %v1024
        %1137 = vmatpush1.bf16.msra.mxu0 %v1023
        %1138 = vmatprep.subr.bf16.mxu0 %v1020
        %1139 = vmatpush1.bf16.msra.mxu0 %v1019
        %1140 = vmatprep.subr.bf16.mxu0 0
        %1141 = vmatpush2.bf16.msra.mxu0 0
        %1142 = vmatprep.subr.bf16.mxu0 0
        %1143 = vmatpush2.bf16.msra.mxu0 0
        %1144 = vmatprep.subr.bf16.mxu0 0
        %1145 = vmatpush2.bf16.msra.mxu0 0
        %1146 = vmatprep.subr.bf16.mxu0 0
        %1147 = vmatpush2.bf16.msra.mxu0 0
        %1148 = vmatprep.subr.bf16.mxu0 0
        %1149 = vmatpush2.bf16.msra.mxu0 0
        %1150 = vmatprep.subr.bf16.mxu0 0
        %1151 = vmatpush2.bf16.msra.mxu0 0
        %1152 = vmatprep.subr.bf16.mxu0 0
        %1153 = vmatpush2.bf16.msra.mxu0 0
        %1154 = vmatprep.subr.bf16.mxu0 0
        %1155 = vmatpush2.bf16.msra.mxu0 0
        %1156 = vmatprep.mubr.bf16.mxu0 0
        %1157 = vmatmul.mubr.bf16.gmra.mxu0 %v751
        %v1158 = vpop.f32.mrf.mxu0
        %v1159 = vadd.f32 %v912, %v1158
        %v1160 = vpop.f32.mrf.mxu0
        %v1161 = vadd.f32 %v916, %v1160
        %v1162 = vpop.f32.mrf.mxu0
        %v1163 = vadd.f32 %v912, %v1162
        %v1164 = vpop.f32.mrf.mxu0
        %v1165 = vadd.f32 %v916, %v1164
        %1166 = vdwg.mxu0
        %v1167 = vld [vmem:[#allocation10] sm:$0xf]
        %v1168 = vld [vmem:[#allocation10 + $0x4] sm:$0xf]
        %v1169 = vld [vmem:[#allocation10 + $0x8] sm:$0xf]
        %v1170 = vld [vmem:[#allocation10 + $0xc] sm:$0xf]
        %v1171 = vld [vmem:[#allocation10 + $0x10] sm:$0xf]
        %v1172 = vld [vmem:[#allocation10 + $0x14] sm:$0xf]
        %v1173 = vld [vmem:[#allocation10 + $0x18] sm:$0xf]
        %v1174 = vld [vmem:[#allocation10 + $0x1c] sm:$0xf]
        %v1175 = vld [vmem:[#allocation10 + $0x20] sm:$0xf]
        %v1176 = vld [vmem:[#allocation10 + $0x24] sm:$0xf]
        %v1177 = vld [vmem:[#allocation10 + $0x28] sm:$0xf]
        %v1178 = vld [vmem:[#allocation10 + $0x2c] sm:$0xf]
        %v1179 = vld [vmem:[#allocation10 + $0x30] sm:$0xf]
        %v1180 = vld [vmem:[#allocation10 + $0x34] sm:$0xf]
        %v1181 = vld [vmem:[#allocation10 + $0x38] sm:$0xf]
        %v1182 = vld [vmem:[#allocation10 + $0x3c] sm:$0xf]
        %v1183 = vld [vmem:[%s10] sm:$0x1]
        %v1185 = vlaneseq
        %v1186 = vshrl.u32 %v1185, 7
        %v1187 = vsub.s32 0, %v1186
        %v1188 = vrot.slane %v1183, %v1187
        %v1206 = vunpack.c.l.b16 %v1167
        %v1207 = vunpack.c.l.b16 %v1168
        %v1208 = vunpack.c.l.b16 %v1169
        %v1209 = vunpack.c.l.b16 %v1170
        %v1210 = vunpack.c.l.b16 %v1171
        %v1211 = vunpack.c.l.b16 %v1172
        %v1212 = vunpack.c.l.b16 %v1173
        %v1213 = vunpack.c.l.b16 %v1174
        %v1214 = vunpack.c.l.b16 %v1175
        %v1215 = vunpack.c.l.b16 %v1176
        %v1216 = vunpack.c.l.b16 %v1177
        %v1217 = vunpack.c.l.b16 %v1178
        %v1218 = vunpack.c.l.b16 %v1179
        %v1219 = vunpack.c.l.b16 %v1180
        %v1220 = vunpack.c.l.b16 %v1181
        %v1221 = vunpack.c.l.b16 %v1182
        %v1222 = vpack.c.b16 %v1207, %v1206
        %v1223 = vpack.c.b16 %v1209, %v1208
        %v1224 = vpack.c.b16 %v1211, %v1210
        %v1225 = vpack.c.b16 %v1213, %v1212
        %v1226 = vpack.c.b16 %v1215, %v1214
        %v1227 = vpack.c.b16 %v1217, %v1216
        %v1228 = vpack.c.b16 %v1219, %v1218
        %v1229 = vpack.c.b16 %v1221, %v1220
        %1238 = vmatprep.subr.bf16.mxu0 0
        %1239 = vmatpush1.bf16.msra.mxu0 %v1229
        %1240 = vmatprep.subr.bf16.mxu0 0
        %1241 = vmatpush1.bf16.msra.mxu0 %v1228
        %1242 = vmatprep.subr.bf16.mxu0 0
        %1243 = vmatpush1.bf16.msra.mxu0 %v1227
        %1244 = vmatprep.subr.bf16.mxu0 0
        %1245 = vmatpush1.bf16.msra.mxu0 %v1226
        %1246 = vmatprep.subr.bf16.mxu0 0
        %1247 = vmatpush1.bf16.msra.mxu0 %v1225
        %1248 = vmatprep.subr.bf16.mxu0 0
        %1249 = vmatpush1.bf16.msra.mxu0 %v1224
        %1250 = vmatprep.subr.bf16.mxu0 0
        %1251 = vmatpush1.bf16.msra.mxu0 %v1223
        %1252 = vmatprep.subr.bf16.mxu0 0
        %1253 = vmatpush1.bf16.msra.mxu0 %v1222
        %1254 = vmatprep.subr.bf16.mxu0 0
        %1255 = vmatpush2.bf16.msra.mxu0 0
        %1256 = vmatprep.subr.bf16.mxu0 0
        %1257 = vmatpush2.bf16.msra.mxu0 0
        %1258 = vmatprep.subr.bf16.mxu0 0
        %1259 = vmatpush2.bf16.msra.mxu0 0
        %1260 = vmatprep.subr.bf16.mxu0 0
        %1261 = vmatpush2.bf16.msra.mxu0 0
        %1262 = vmatprep.subr.bf16.mxu0 0
        %1263 = vmatpush2.bf16.msra.mxu0 0
        %1264 = vmatprep.subr.bf16.mxu0 0
        %1265 = vmatpush2.bf16.msra.mxu0 0
        %1266 = vmatprep.subr.bf16.mxu0 0
        %1267 = vmatpush2.bf16.msra.mxu0 0
        %1268 = vmatprep.subr.bf16.mxu0 0
        %1269 = vmatpush2.bf16.msra.mxu0 0
        %1270 = vmatprep.mubr.bf16.mxu0 0
        %1271 = vmatmul.mubr.bf16.gmra.mxu0 %v866
        %v1272 = vpop.f32.mrf.mxu0
        %v1273 = vadd.f32 %v1188, %v1272
        %v1274 = vpop.f32.mrf.mxu0
        %v1275 = vpop.f32.mrf.mxu0
        %v1276 = vadd.f32 %v1188, %v1275
        %v1277 = vpop.f32.mrf.mxu0
        %1278 = vdwg.mxu0
        %v1279 = vld [vmem:[%s549] sm:$0xff]
        %v1280 = vld [vmem:[%s549 + $0x8] sm:$0xff]
        %vm1281 = vcmp.eq.s32.totalorder %v1279, 0
        %vm1282 = vcmp.eq.s32.totalorder %v1280, 0
        %v1283 = vsel %vm1281, %v1116, 0.0
        %v1284 = vsel %vm1282, %v1120, 0.0
        %v1285 = vadd.f32 %v1283, 0.0
        %v1286 = vadd.f32 %v1284, 0.0
        %vm1287 = vcmp.eq.s32.totalorder %v1279, 1
        %vm1288 = vcmp.eq.s32.totalorder %v1280, 1
        %v1289 = vsel %vm1287, %v1118, 0.0
        %v1290 = vsel %vm1288, %v1122, 0.0
        %v1291 = vadd.f32 %v1285, %v1289
        %v1292 = vadd.f32 %v1286, %v1290
        %vm1293 = vcmp.eq.s32.totalorder %v1279, 2
        %vm1294 = vcmp.eq.s32.totalorder %v1280, 2
        %v1295 = vsel %vm1293, %v1159, 0.0
        %v1296 = vsel %vm1294, %v1163, 0.0
        %v1297 = vadd.f32 %v1291, %v1295
        %v1298 = vadd.f32 %v1292, %v1296
        %vm1299 = vcmp.eq.s32.totalorder %v1279, 3
        %vm1300 = vcmp.eq.s32.totalorder %v1280, 3
        %v1301 = vsel %vm1299, %v1161, 0.0
        %v1302 = vsel %vm1300, %v1165, 0.0
        %v1303 = vadd.f32 %v1297, %v1301
        %v1304 = vadd.f32 %v1298, %v1302
        %v1305 = vadd.f32 %v1273, %v1303
        %v1306 = vadd.f32 %v1276, %v1304
        %1307 = vmax.xlane.f32.xlu0 %v1305
        %v1308 = vpop.xlane.xlu0 %1307
        %1309 = vmax.xlane.f32.xlu0 %v1306
        %v1310 = vpop.xlane.xlu0 %1309
        %v1311 = vsub.f32 %v1305, %v1308
        %v1312 = vsub.f32 %v1306, %v1310
        %v1313 = vmul.f32 %v1311, 1.442695
        %v1314 = vpow.pop %v1313
        %v1315 = vmul.f32 %v1312, 1.442695
        %v1316 = vpow.pop %v1315
        %v1317 = vld [vmem:[#allocation11] sm:$0xff]
        %v1318 = vld [vmem:[#allocation11 + $0x8] sm:$0xff]
        %v1319 = vld [vmem:[#allocation11 + $0x10] sm:$0xff]
        %v1320 = vld [vmem:[#allocation11 + $0x18] sm:$0xff]
        %v1321 = vld [vmem:[#allocation11 + $0x20] sm:$0xff]
        %v1322 = vld [vmem:[#allocation11 + $0x28] sm:$0xff]
        %v1323 = vld [vmem:[#allocation11 + $0x30] sm:$0xff]
        %v1324 = vld [vmem:[#allocation11 + $0x38] sm:$0xff]
        %v1325 = vld [vmem:[#allocation11 + $0x40] sm:$0xff]
        %v1326 = vld [vmem:[#allocation11 + $0x48] sm:$0xff]
        %v1327 = vld [vmem:[#allocation11 + $0x50] sm:$0xff]
        %v1328 = vld [vmem:[#allocation11 + $0x58] sm:$0xff]
        %v1329 = vld [vmem:[#allocation11 + $0x60] sm:$0xff]
        %v1330 = vld [vmem:[#allocation11 + $0x68] sm:$0xff]
        %v1331 = vld [vmem:[#allocation11 + $0x70] sm:$0xff]
        %v1332 = vld [vmem:[#allocation11 + $0x78] sm:$0xff]
        %1333 = vmatprep.subr.mxu0 0.0
        %1334 = vmatpush1.msra.mxu0 %v1332
        %1335 = vmatprep.subr.mxu0 0.0
        %1336 = vmatpush1.msra.mxu0 %v1331
        %1337 = vmatprep.subr.mxu0 0.0
        %1338 = vmatpush1.msra.mxu0 %v1330
        %1339 = vmatprep.subr.mxu0 0.0
        %1340 = vmatpush1.msra.mxu0 %v1329
        %1341 = vmatprep.subr.mxu0 0.0
        %1342 = vmatpush1.msra.mxu0 %v1328
        %1343 = vmatprep.subr.mxu0 0.0
        %1344 = vmatpush1.msra.mxu0 %v1327
        %1345 = vmatprep.subr.mxu0 0.0
        %1346 = vmatpush1.msra.mxu0 %v1326
        %1347 = vmatprep.subr.mxu0 0.0
        %1348 = vmatpush1.msra.mxu0 %v1325
        %1349 = vmatprep.subr.mxu0 0.0
        %1350 = vmatpush1.msra.mxu0 %v1324
        %1351 = vmatprep.subr.mxu0 0.0
        %1352 = vmatpush1.msra.mxu0 %v1323
        %1353 = vmatprep.subr.mxu0 0.0
        %1354 = vmatpush1.msra.mxu0 %v1322
        %1355 = vmatprep.subr.mxu0 0.0
        %1356 = vmatpush1.msra.mxu0 %v1321
        %1357 = vmatprep.subr.mxu0 0.0
        %1358 = vmatpush1.msra.mxu0 %v1320
        %1359 = vmatprep.subr.mxu0 0.0
        %1360 = vmatpush1.msra.mxu0 %v1319
        %1361 = vmatprep.subr.mxu0 0.0
        %1362 = vmatpush1.msra.mxu0 %v1318
        %1363 = vmatprep.subr.mxu0 0.0
        %1364 = vmatpush1.msra.mxu0 %v1317
        %1365 = vmatprep.subr.mxu0 0.0
        %1366 = vmatpush2.msra.mxu0 0.0
        %1367 = vmatprep.subr.mxu0 0.0
        %1368 = vmatpush2.msra.mxu0 0.0
        %1369 = vmatprep.subr.mxu0 0.0
        %1370 = vmatpush2.msra.mxu0 0.0
        %1371 = vmatprep.subr.mxu0 0.0
        %1372 = vmatpush2.msra.mxu0 0.0
        %1373 = vmatprep.subr.mxu0 0.0
        %1374 = vmatpush2.msra.mxu0 0.0
        %1375 = vmatprep.subr.mxu0 0.0
        %1376 = vmatpush2.msra.mxu0 0.0
        %1377 = vmatprep.subr.mxu0 0.0
        %1378 = vmatpush2.msra.mxu0 0.0
        %1379 = vmatprep.subr.mxu0 0.0
        %1380 = vmatpush2.msra.mxu0 0.0
        %1381 = vmatprep.subr.mxu0 0.0
        %1382 = vmatpush2.msra.mxu0 0.0
        %1383 = vmatprep.subr.mxu0 0.0
        %1384 = vmatpush2.msra.mxu0 0.0
        %1385 = vmatprep.subr.mxu0 0.0
        %1386 = vmatpush2.msra.mxu0 0.0
        %1387 = vmatprep.subr.mxu0 0.0
        %1388 = vmatpush2.msra.mxu0 0.0
        %1389 = vmatprep.subr.mxu0 0.0
        %1390 = vmatpush2.msra.mxu0 0.0
        %1391 = vmatprep.subr.mxu0 0.0
        %1392 = vmatpush2.msra.mxu0 0.0
        %1393 = vmatprep.subr.mxu0 0.0
        %1394 = vmatpush2.msra.mxu0 0.0
        %1395 = vmatprep.subr.mxu0 0.0
        %1396 = vmatpush2.msra.mxu0 0.0
        %1397 = vmatprep.mubr.f32.mxu0 0.0
        %1398 = vmatmul.mubr.f32.gmra.mxu0 %v1314
        %v1399 = vpop.f32.mrf.mxu0
        %v1400 = vadd.f32 0.0, %v1399
        %v1401 = vpop.f32.mrf.mxu0
        %1402 = vmatprep.mubr.f32.mxu0 0.0
        %1403 = vmatmul.mubr.f32.gmra.mxu0 %v1316
        %v1404 = vpop.f32.mrf.mxu0
        %v1405 = vadd.f32 0.0, %v1404
        %v1406 = vpop.f32.mrf.mxu0
        %1407 = vdwg.mxu0
        %v1408 = vrcp.pop %v1400
        %v1409 = vrcp.pop %v1405
        %v1410 = vmul.f32 %v1314, %v1408
        %v1411 = vmul.f32 %v1316, %v1409
        %1412 = vst [vmem:[%s538] sm:$0xff] %v1410
        %1413 = vst [vmem:[%s538 + $0x8] sm:$0xff] %v1411
        %s1414 = sand.u32 %s322, 1
        %s1415 = scalar_lea.sflag [#allocation4], %s1414
        %s1416 = sand.u32 %s322, 1
        %s1417 = smul.addr %s1416, 16
        %s1418 = scalar_lea.vmem [#allocation13], %s1417
        // Predicated region
        $region97: #{tpu_custom_call.1} parent=71 // pred_check
          %p1419 = pneg %p332
        $region98: #{tpu_custom_call.1} parent=71 // pred_check_branch
          %1421 = sbr.rel (%p1419) target = $region100
        $region99: #{tpu_custom_call.1} parent=71 // pred_region
          %s1422 = smul.u32 2, %s31
          %s1424 = ssub.s32 256, 256
          %1425 = vsyncadd %s1415, %s1424
          %s1426 = smul.addr %s1422, 128
          %s1427 = scalar_lea.hbm %s13, %s1426
          %s1428 = sshll.u32 %s1418, 4
          %s1429 = int_to_ptr.vmem [resolvable:$true] %s1428
          %1434 = dma.vmem_to_hbm [thread:$0]  %s1429, 256, %s1427, %s1415, 128, 128, 8
        $region100: #{tpu_custom_call.1} parent=71 // pred_fallthru
          _
      $region72: #{tpu_custom_call.1} parent=5 // pred_fallthru
        _
      %p1435 = scmp.le.s32.totalorder 2, %s26
      // Predicated region
      $region101: #{tpu_custom_call.1} parent=5 // pred_check
        %p1436 = pneg %p1435
      $region102: #{tpu_custom_call.1} parent=5 // pred_check_branch
        %1438 = sbr.rel (%p1436) target = $region104
      $region103: #{tpu_custom_call.1} parent=5 // pred_region
        %s1439 = ssub.s32 %s26, 2
        // Predicated region
        $region105: #{tpu_custom_call.1} parent=103 // pred_check
          %p1440 = pneg %p338
        $region106: #{tpu_custom_call.1} parent=103 // pred_check_branch
          %1442 = sbr.rel (%p1440) target = $region108
        $region107: #{tpu_custom_call.1} parent=103 // pred_region
          %s1443 = sand.u32 %s323, 1
          %s1444 = scalar_lea.sflag [#allocation4], %s1443
          %s1445 = sand.u32 %s323, 1
          %s1446 = smul.addr %s1445, 16
          %s1447 = scalar_lea.vmem [#allocation13], %s1446
          %1448 = dma.done %s1444, 256
        $region108: #{tpu_custom_call.1} parent=103 // pred_fallthru
          _
      $region104: #{tpu_custom_call.1} parent=5 // pred_fallthru
        _
    $region6: #{tpu_custom_call.1} parent=1 // loop_footer
      %s30 = sadd.s32 1, %s26
    $region7: #{tpu_custom_call.1} parent=1 // loop_footer_branch
      %25 = sbr.rel target = $region3
    $region8: #{tpu_custom_call.1} parent=1 // loop_exit
      _
    %1449 = vsyncpa [#allocation3], 1
    %s1450 = scalar_lea.sflag [#allocation3], 1
    %1451 = vsyncpa %s1450, 1
    %1452 = vsyncpa [#allocation6], 1
    %1453 = vsyncpa [#allocation9], 1
    %1454 = vsyncpa [#allocation12], 1
    %1455 = vsyncpa [#allocation4], 1
    %s1456 = scalar_lea.sflag [#allocation4], 1
    %1457 = vsyncpa %s1456, 1

</llo_original>
